<compile_context>
chip_gen: v7x
topology: tpu7x:2x2x1
jax: 0.10.0
libtpu: 0.0.40
codegen_flags: <defaults>
</compile_context>

<pallas_src>
import jax
import jax.numpy as jnp
from jax.experimental import pallas as pl
from jax.experimental.pallas import tpu as pltpu

NUM_FEATURES = 4      # dataset.num_features (synthetic)
NOUT = 32
NIN = 3 * NOUT        # concat=True
NSLAB = 4 * NOUT      # 96 hidden lanes zero-padded to 128


def gnnml1_kernel(x_ref, a_ref, p_ref,
                  # layer 1 (x-side fused, conv kept in original (A@x)@Wc order)
                  w1_ref, b1_ref, wc1_ref, bc1_ref,
                  # layers 2 & 3 (all four weights fused, conv reassociated)
                  w2_ref, b2_ref, bc2_ref,
                  w3_ref, b3_ref, bc3_ref,
                  # head
                  wh1_ref, bh1_ref, wh2_ref, bh2_ref,
                  out_ref,
                  slab_ref):
    a = a_ref[...]                                   # [N, N] bf16 (exact int counts)
    n = slab_ref.shape[0]

    # ---------------- layer 1 : F = 4, keep (A @ x) @ Wc ----------------
    # TODO(synk): F.dropout(p=0.2) omitted (inference / training=False path).
    xb = x_ref[...]                                  # [N, F] bf16
    t = jnp.dot(xb, w1_ref[...], preferred_element_type=jnp.float32) + b1_ref[...]
    h1 = jnp.maximum(t[:, 0:NOUT], 0.0)
    h3 = jnp.maximum(t[:, 2 * NOUT:3 * NOUT] * t[:, 3 * NOUT:4 * NOUT], 0.0)
    ax = jnp.dot(a, xb, preferred_element_type=jnp.float32)        # [N, F] f32
    h2 = jnp.maximum(
        jnp.dot(ax.astype(jnp.bfloat16), wc1_ref[...],
                preferred_element_type=jnp.float32) + bc1_ref[...], 0.0)

    # lane-dense slab: [h1 | h2 | h3 | zeros], no concatenate.
    slab_ref[:, 3 * NOUT:4 * NOUT] = jnp.zeros((n, NOUT), slab_ref.dtype)
    slab_ref[:, 0:NOUT] = h1
    slab_ref[:, NOUT:2 * NOUT] = h2
    slab_ref[:, 2 * NOUT:3 * NOUT] = h3

    # ------------- layers 2 & 3 : fused x-side matmul + A @ (x @ Wc) -------------
    for w_ref, b_ref, bc_ref in ((w2_ref, b2_ref, bc2_ref),
                                 (w3_ref, b3_ref, bc3_ref)):
        xs = slab_ref[...].astype(jnp.bfloat16)                    # [N, 128] bf16
        t = jnp.dot(xs, w_ref[...], preferred_element_type=jnp.float32) + b_ref[...]
        h1 = jnp.maximum(t[:, 0:NOUT], 0.0)
        h3 = jnp.maximum(t[:, 2 * NOUT:3 * NOUT] * t[:, 3 * NOUT:4 * NOUT], 0.0)
        # conv: bias block of b is zero, so t[:, 32:64] == x @ Wc exactly.
        xwc = t[:, NOUT:2 * NOUT].astype(jnp.bfloat16)             # [N, 32] bf16
        h2 = jnp.maximum(
            jnp.dot(a, xwc, preferred_element_type=jnp.float32) + bc_ref[...], 0.0)
        slab_ref[:, 0:NOUT] = h1
        slab_ref[:, NOUT:2 * NOUT] = h2
        slab_ref[:, 2 * NOUT:3 * NOUT] = h3

    # ------------------------------- head --------------------------------
    # global_mean_pool (tiny: keep in f32), then fc1 + relu, fc2.
    pooled = jnp.dot(p_ref[...], slab_ref[...],
                     preferred_element_type=jnp.float32)           # [G, 128]
    h = jnp.maximum(jnp.dot(pooled, wh1_ref[...],
                            preferred_element_type=jnp.float32) + bh1_ref[...], 0.0)
    out_ref[...] = jnp.dot(h, wh2_ref[...],
                           preferred_element_type=jnp.float32) + bh2_ref[...]


def _pack_params(params):
    """Fuse / pad the 28 natural parameters for the lane-dense kernel layout."""
    (w11, b11, wc1, bc1, w12, b12, w13, b13,
     w21, b21, wc2, bc2, w22, b22, w23, b23,
     w31, b31, wc3, bc3, w32, b32, w33, b33,
     wfc1, bfc1, wfc2, bfc2) = params
    f32, bf16 = jnp.float32, jnp.bfloat16
    zb = jnp.zeros((1, NOUT), f32)

    # layer 1: fuse [fc11 | 0 | fc12 | fc13] -> [F, 128]; conv weight separate.
    w1 = jnp.concatenate(
        [w11, jnp.zeros((NUM_FEATURES, NOUT), f32), w12, w13], axis=1).astype(bf16)
    b1 = jnp.concatenate([b11, zb, b12, b13], axis=1)              # [1, 128] f32

    def fuse(wa, wc, wb, wd, ba, bb, bd):
        # columns: [fc_a | conv | fc_b | fc_c]; rows padded 96 -> 128 (zero pad lanes).
        w = jnp.concatenate([wa, wc, wb, wd], axis=1)              # [96, 128]
        w = jnp.concatenate([w, jnp.zeros((NOUT, NSLAB), f32)], axis=0)  # [128, 128]
        b = jnp.concatenate([ba, zb, bb, bd], axis=1)              # conv bias added post-A
        return w.astype(bf16), b

    w2, b2 = fuse(w21, wc2, w22, w23, b21, b22, b23)
    w3, b3 = fuse(w31, wc3, w32, w33, b31, b32, b33)

    wh1 = jnp.concatenate([wfc1, jnp.zeros((NOUT, 32), f32)], axis=0)   # [128, 32] f32

    return [w1, b1, wc1.astype(bf16), bc1,
            w2, b2, bc2,
            w3, b3, bc3,
            wh1, bfc1, wfc2, bfc2]


def gnnml1_forward(x, adj, pool, params):
    """x [N,F], adj [N,N] dense, pool [G,N] mean-pool matrix, params = 28 arrays."""
    packed = _pack_params(params)
    x_bf = x.astype(jnp.bfloat16)
    a_bf = adj.astype(jnp.bfloat16)       # integer edge multiplicities: exact in bf16
    n = x.shape[0]
    g = pool.shape[0]
    inputs = [x_bf, a_bf, pool, *packed]

    vmem_spec = pl.BlockSpec(memory_space=pltpu.MemorySpace.VMEM)

    # Explicit scoped-VMEM limit: resident inputs + slab scratch + output, x2 + headroom,
    # floored at the 32 MiB default and capped under v7x's 64 MiB physical VMEM.
    nbytes = sum(int(t.size) * t.dtype.itemsize for t in inputs)
    nbytes += n * NSLAB * 4 + g * 4
    vmem_limit = int(min(max(2 * nbytes + (4 << 20), 32 << 20), 64 << 20))

    return pl.pallas_call(
        gnnml1_kernel,
        out_shape=jax.ShapeDtypeStruct((g, 1), jnp.float32),
        in_specs=[vmem_spec] * len(inputs),
        out_specs=vmem_spec,
        scratch_shapes=[pltpu.VMEM((n, NSLAB), jnp.float32)],
        compiler_params=pltpu.CompilerParams(vmem_limit_bytes=vmem_limit),
    )(*inputs)


def make_params(key):
    """Deterministic synthetic parameters matching GNNML1.__init__ shapes."""
    def lin(k, fan_in, fan_out):
        kw, kb = jax.random.split(k)
        w = jax.random.normal(kw, (fan_in, fan_out), jnp.float32) * (1.0 / jnp.sqrt(fan_in))
        b = jax.random.normal(kb, (1, fan_out), jnp.float32) * 0.05
        return w, b

    keys = jax.random.split(key, 14)
    params = []
    # layer 1: fc11, conv11 (SpectConv weight [1, in, out] -> [in, out]), fc12, fc13
    params += list(lin(keys[0], NUM_FEATURES, NOUT))   # w11, b11
    params += list(lin(keys[1], NUM_FEATURES, NOUT))   # wc1, bc1
    params += list(lin(keys[2], NUM_FEATURES, NOUT))   # w12, b12
    params += list(lin(keys[3], NUM_FEATURES, NOUT))   # w13, b13
    # layer 2
    params += list(lin(keys[4], NIN, NOUT))            # w21, b21
    params += list(lin(keys[5], NIN, NOUT))            # wc2, bc2
    params += list(lin(keys[6], NIN, NOUT))            # w22, b22
    params += list(lin(keys[7], NIN, NOUT))            # w23, b23
    # layer 3
    params += list(lin(keys[8], NIN, NOUT))            # w31, b31
    params += list(lin(keys[9], NIN, NOUT))            # wc3, bc3
    params += list(lin(keys[10], NIN, NOUT))           # w32, b32
    params += list(lin(keys[11], NIN, NOUT))           # w33, b33
    # head
    params += list(lin(keys[12], NIN, 32))             # wfc1, bfc1
    params += list(lin(keys[13], 32, 1))               # wfc2, bfc2
    return params


def reference_forward(x, adj, pool, params):
    """Pure f32 JAX reference matching the PyTorch forward (eval mode)."""
    (w11, b11, wc1, bc1, w12, b12, w13, b13,
     w21, b21, wc2, bc2, w22, b22, w23, b23,
     w31, b31, wc3, bc3, w32, b32, w33, b33,
     wfc1, bfc1, wfc2, bfc2) = params

    def layer(h, wa, ba, wc, bc, wb, bb, wd, bd):
        ah = adj @ h
        return jnp.concatenate([
            jax.nn.relu(h @ wa + ba),
            jax.nn.relu(ah @ wc + bc),
            jax.nn.relu((h @ wb + bb) * (h @ wd + bd)),
        ], axis=1)

    h = layer(x, w11, b11, wc1, bc1, w12, b12, w13, b13)
    h = layer(h, w21, b21, wc2, bc2, w22, b22, w23, b23)
    h = layer(h, w31, b31, wc3, bc3, w32, b32, w33, b33)
    pooled = pool @ h
    return jax.nn.relu(pooled @ wfc1 + bfc1) @ wfc2 + bfc2


if __name__ == "__main__":
    key = jax.random.PRNGKey(0)
    k_x, k_e, k_p = jax.random.split(key, 3)

    num_nodes = 64
    num_edges = 256
    num_graphs = 2

    # Node features [N, F]
    x = jax.random.normal(k_x, (num_nodes, NUM_FEATURES), jnp.float32)

    # Random edge_index [2, E]; build dense adjacency A[dst, src] += 1
    edge_index = jax.random.randint(k_e, (2, num_edges), 0, num_nodes)
    adj = jnp.zeros((num_nodes, num_nodes), jnp.float32)
    adj = adj.at[edge_index[1], edge_index[0]].add(1.0)

    # Two graphs of 32 nodes each -> pooling matrix [G, N]
    batch = jnp.concatenate([jnp.zeros(32, jnp.int32), jnp.ones(32, jnp.int32)])
    one_hot = jax.nn.one_hot(batch, num_graphs, dtype=jnp.float32).T      # [G, N]
    counts = one_hot.sum(axis=1, keepdims=True)
    pool = one_hot / counts

    params = make_params(k_p)

    out = gnnml1_forward(x, adj, pool, params)
    out = jax.block_until_ready(out)

    ref = jax.block_until_ready(reference_forward(x, adj, pool, params))
    assert out.shape == (num_graphs, 1)
    # Slightly relaxed tolerance: MXU inputs are bf16 (f32 accumulation).
    assert jnp.allclose(out, ref, atol=3e-2, rtol=3e-2), (out, ref)

    print("KERNEL_OK")
</pallas_src>

<mosaic_0001>
module attributes {stable_mosaic.version = 11 : i64} {
  func.func @gnnml1_kernel(%arg0: memref<64x4xbf16, #tpu.memory_space<vmem>>, %arg1: memref<64x64xbf16, #tpu.memory_space<vmem>>, %arg2: memref<2x64xf32, #tpu.memory_space<vmem>>, %arg3: memref<4x128xbf16, #tpu.memory_space<vmem>>, %arg4: memref<1x128xf32, #tpu.memory_space<vmem>>, %arg5: memref<4x32xbf16, #tpu.memory_space<vmem>>, %arg6: memref<1x32xf32, #tpu.memory_space<vmem>>, %arg7: memref<128x128xbf16, #tpu.memory_space<vmem>>, %arg8: memref<1x128xf32, #tpu.memory_space<vmem>>, %arg9: memref<1x32xf32, #tpu.memory_space<vmem>>, %arg10: memref<128x128xbf16, #tpu.memory_space<vmem>>, %arg11: memref<1x128xf32, #tpu.memory_space<vmem>>, %arg12: memref<1x32xf32, #tpu.memory_space<vmem>>, %arg13: memref<128x32xf32, #tpu.memory_space<vmem>>, %arg14: memref<1x32xf32, #tpu.memory_space<vmem>>, %arg15: memref<32x1xf32, #tpu.memory_space<vmem>>, %arg16: memref<1x1xf32, #tpu.memory_space<vmem>>, %arg17: memref<2x1xf32, #tpu.memory_space<vmem>>, %arg18: memref<64x128xf32, #tpu.memory_space<vmem>>) attributes {dimension_semantics = [], scalar_prefetch = 0 : i64, scratch_operands = 1 : i64, tpu.core_type = #tpu.core_type<tc>} {
    %c0 = arith.constant 0 : index
    %c0_0 = arith.constant 0 : index
    %0 = vector.load %arg1[%c0, %c0_0] : memref<64x64xbf16, #tpu.memory_space<vmem>>, vector<64x64xbf16>
    %c0_1 = arith.constant 0 : index
    %c0_2 = arith.constant 0 : index
    %1 = vector.load %arg0[%c0_1, %c0_2] : memref<64x4xbf16, #tpu.memory_space<vmem>>, vector<64x4xbf16>
    %c0_3 = arith.constant 0 : index
    %c0_4 = arith.constant 0 : index
    %2 = vector.load %arg3[%c0_3, %c0_4] : memref<4x128xbf16, #tpu.memory_space<vmem>>, vector<4x128xbf16>
    %cst = arith.constant dense<0.000000e+00> : vector<64x128xf32>
    %3 = tpu.matmul %1, %2, %cst {dimension_numbers = #tpu.dot_dimension_numbers<[1], [0], [0], [1], [0, 0, 1, 1], [], []>} : vector<64x4xbf16>, vector<4x128xbf16>, vector<64x128xf32> -> vector<64x128xf32>
    %c0_5 = arith.constant 0 : index
    %c0_6 = arith.constant 0 : index
    %4 = vector.load %arg4[%c0_5, %c0_6] : memref<1x128xf32, #tpu.memory_space<vmem>>, vector<1x128xf32>
    %5 = vector.broadcast %4 : vector<1x128xf32> to vector<64x128xf32>
    %6 = arith.addf %3, %5 : vector<64x128xf32>
    %7 = vector.extract_strided_slice %6 {offsets = [0, 0], sizes = [64, 32], strides = [1, 1]} : vector<64x128xf32> to vector<64x32xf32>
    %cst_7 = arith.constant 0.000000e+00 : f32
    %8 = vector.broadcast %cst_7 : f32 to vector<64x32xf32>
    %9 = arith.maximumf %7, %8 : vector<64x32xf32>
    %10 = vector.extract_strided_slice %6 {offsets = [0, 64], sizes = [64, 32], strides = [1, 1]} : vector<64x128xf32> to vector<64x32xf32>
    %11 = vector.extract_strided_slice %6 {offsets = [0, 96], sizes = [64, 32], strides = [1, 1]} : vector<64x128xf32> to vector<64x32xf32>
    %12 = arith.mulf %10, %11 : vector<64x32xf32>
    %cst_8 = arith.constant 0.000000e+00 : f32
    %13 = vector.broadcast %cst_8 : f32 to vector<64x32xf32>
    %14 = arith.maximumf %12, %13 : vector<64x32xf32>
    %cst_9 = arith.constant dense<0.000000e+00> : vector<64x4xf32>
    %15 = tpu.matmul %0, %1, %cst_9 {dimension_numbers = #tpu.dot_dimension_numbers<[1], [0], [0], [1], [0, 0, 1, 1], [], []>} : vector<64x64xbf16>, vector<64x4xbf16>, vector<64x4xf32> -> vector<64x4xf32>
    %16 = arith.truncf %15 : vector<64x4xf32> to vector<64x4xbf16>
    %c0_10 = arith.constant 0 : index
    %c0_11 = arith.constant 0 : index
    %17 = vector.load %arg5[%c0_10, %c0_11] : memref<4x32xbf16, #tpu.memory_space<vmem>>, vector<4x32xbf16>
    %cst_12 = arith.constant dense<0.000000e+00> : vector<64x32xf32>
    %18 = tpu.matmul %16, %17, %cst_12 {dimension_numbers = #tpu.dot_dimension_numbers<[1], [0], [0], [1], [0, 0, 1, 1], [], []>} : vector<64x4xbf16>, vector<4x32xbf16>, vector<64x32xf32> -> vector<64x32xf32>
    %c0_13 = arith.constant 0 : index
    %c0_14 = arith.constant 0 : index
    %19 = vector.load %arg6[%c0_13, %c0_14] : memref<1x32xf32, #tpu.memory_space<vmem>>, vector<1x32xf32>
    %20 = vector.broadcast %19 : vector<1x32xf32> to vector<64x32xf32>
    %21 = arith.addf %18, %20 : vector<64x32xf32>
    %cst_15 = arith.constant 0.000000e+00 : f32
    %22 = vector.broadcast %cst_15 : f32 to vector<64x32xf32>
    %23 = arith.maximumf %21, %22 : vector<64x32xf32>
    %cst_16 = arith.constant 0.000000e+00 : f32
    %24 = vector.broadcast %cst_16 : f32 to vector<64x32xf32>
    %c0_17 = arith.constant 0 : index
    %c96 = arith.constant 96 : index
    %25 = vector.load %arg18[%c0_17, %c96] : memref<64x128xf32, #tpu.memory_space<vmem>>, vector<64x32xf32>
    tpu.vector_store %arg18[%c0_17, %c96], %24 {strides = array<i32>} : memref<64x128xf32, #tpu.memory_space<vmem>>, vector<64x32xf32>,
    %c0_18 = arith.constant 0 : index
    %c0_19 = arith.constant 0 : index
    %26 = vector.load %arg18[%c0_18, %c0_19] : memref<64x128xf32, #tpu.memory_space<vmem>>, vector<64x32xf32>
    tpu.vector_store %arg18[%c0_18, %c0_19], %9 {strides = array<i32>} : memref<64x128xf32, #tpu.memory_space<vmem>>, vector<64x32xf32>,
    %c0_20 = arith.constant 0 : index
    %c32 = arith.constant 32 : index
    %27 = vector.load %arg18[%c0_20, %c32] : memref<64x128xf32, #tpu.memory_space<vmem>>, vector<64x32xf32>
    tpu.vector_store %arg18[%c0_20, %c32], %23 {strides = array<i32>} : memref<64x128xf32, #tpu.memory_space<vmem>>, vector<64x32xf32>,
    %c0_21 = arith.constant 0 : index
    %c64 = arith.constant 64 : index
    %28 = vector.load %arg18[%c0_21, %c64] : memref<64x128xf32, #tpu.memory_space<vmem>>, vector<64x32xf32>
    tpu.vector_store %arg18[%c0_21, %c64], %14 {strides = array<i32>} : memref<64x128xf32, #tpu.memory_space<vmem>>, vector<64x32xf32>,
    %c0_22 = arith.constant 0 : index
    %c0_23 = arith.constant 0 : index
    %29 = vector.load %arg18[%c0_22, %c0_23] : memref<64x128xf32, #tpu.memory_space<vmem>>, vector<64x128xf32>
    %30 = arith.truncf %29 : vector<64x128xf32> to vector<64x128xbf16>
    %c0_24 = arith.constant 0 : index
    %c0_25 = arith.constant 0 : index
    %31 = vector.load %arg7[%c0_24, %c0_25] : memref<128x128xbf16, #tpu.memory_space<vmem>>, vector<128x128xbf16>
    %cst_26 = arith.constant dense<0.000000e+00> : vector<64x128xf32>
    %32 = tpu.matmul %30, %31, %cst_26 {dimension_numbers = #tpu.dot_dimension_numbers<[1], [0], [0], [1], [0, 0, 1, 1], [], []>} : vector<64x128xbf16>, vector<128x128xbf16>, vector<64x128xf32> -> vector<64x128xf32>
    %c0_27 = arith.constant 0 : index
    %c0_28 = arith.constant 0 : index
    %33 = vector.load %arg8[%c0_27, %c0_28] : memref<1x128xf32, #tpu.memory_space<vmem>>, vector<1x128xf32>
    %34 = vector.broadcast %33 : vector<1x128xf32> to vector<64x128xf32>
    %35 = arith.addf %32, %34 : vector<64x128xf32>
    %36 = vector.extract_strided_slice %35 {offsets = [0, 0], sizes = [64, 32], strides = [1, 1]} : vector<64x128xf32> to vector<64x32xf32>
    %cst_29 = arith.constant 0.000000e+00 : f32
    %37 = vector.broadcast %cst_29 : f32 to vector<64x32xf32>
    %38 = arith.maximumf %36, %37 : vector<64x32xf32>
    %39 = vector.extract_strided_slice %35 {offsets = [0, 64], sizes = [64, 32], strides = [1, 1]} : vector<64x128xf32> to vector<64x32xf32>
    %40 = vector.extract_strided_slice %35 {offsets = [0, 96], sizes = [64, 32], strides = [1, 1]} : vector<64x128xf32> to vector<64x32xf32>
    %41 = arith.mulf %39, %40 : vector<64x32xf32>
    %cst_30 = arith.constant 0.000000e+00 : f32
    %42 = vector.broadcast %cst_30 : f32 to vector<64x32xf32>
    %43 = arith.maximumf %41, %42 : vector<64x32xf32>
    %44 = vector.extract_strided_slice %35 {offsets = [0, 32], sizes = [64, 32], strides = [1, 1]} : vector<64x128xf32> to vector<64x32xf32>
    %45 = arith.truncf %44 : vector<64x32xf32> to vector<64x32xbf16>
    %cst_31 = arith.constant dense<0.000000e+00> : vector<64x32xf32>
    %46 = tpu.matmul %0, %45, %cst_31 {dimension_numbers = #tpu.dot_dimension_numbers<[1], [0], [0], [1], [0, 0, 1, 1], [], []>} : vector<64x64xbf16>, vector<64x32xbf16>, vector<64x32xf32> -> vector<64x32xf32>
    %c0_32 = arith.constant 0 : index
    %c0_33 = arith.constant 0 : index
    %47 = vector.load %arg9[%c0_32, %c0_33] : memref<1x32xf32, #tpu.memory_space<vmem>>, vector<1x32xf32>
    %48 = vector.broadcast %47 : vector<1x32xf32> to vector<64x32xf32>
    %49 = arith.addf %46, %48 : vector<64x32xf32>
    %cst_34 = arith.constant 0.000000e+00 : f32
    %50 = vector.broadcast %cst_34 : f32 to vector<64x32xf32>
    %51 = arith.maximumf %49, %50 : vector<64x32xf32>
    %c0_35 = arith.constant 0 : index
    %c0_36 = arith.constant 0 : index
    %52 = vector.load %arg18[%c0_35, %c0_36] : memref<64x128xf32, #tpu.memory_space<vmem>>, vector<64x32xf32>
    tpu.vector_store %arg18[%c0_35, %c0_36], %38 {strides = array<i32>} : memref<64x128xf32, #tpu.memory_space<vmem>>, vector<64x32xf32>,
    %c0_37 = arith.constant 0 : index
    %c32_38 = arith.constant 32 : index
    %53 = vector.load %arg18[%c0_37, %c32_38] : memref<64x128xf32, #tpu.memory_space<vmem>>, vector<64x32xf32>
    tpu.vector_store %arg18[%c0_37, %c32_38], %51 {strides = array<i32>} : memref<64x128xf32, #tpu.memory_space<vmem>>, vector<64x32xf32>,
    %c0_39 = arith.constant 0 : index
    %c64_40 = arith.constant 64 : index
    %54 = vector.load %arg18[%c0_39, %c64_40] : memref<64x128xf32, #tpu.memory_space<vmem>>, vector<64x32xf32>
    tpu.vector_store %arg18[%c0_39, %c64_40], %43 {strides = array<i32>} : memref<64x128xf32, #tpu.memory_space<vmem>>, vector<64x32xf32>,
    %c0_41 = arith.constant 0 : index
    %c0_42 = arith.constant 0 : index
    %55 = vector.load %arg18[%c0_41, %c0_42] : memref<64x128xf32, #tpu.memory_space<vmem>>, vector<64x128xf32>
    %56 = arith.truncf %55 : vector<64x128xf32> to vector<64x128xbf16>
    %c0_43 = arith.constant 0 : index
    %c0_44 = arith.constant 0 : index
    %57 = vector.load %arg10[%c0_43, %c0_44] : memref<128x128xbf16, #tpu.memory_space<vmem>>, vector<128x128xbf16>
    %cst_45 = arith.constant dense<0.000000e+00> : vector<64x128xf32>
    %58 = tpu.matmul %56, %57, %cst_45 {dimension_numbers = #tpu.dot_dimension_numbers<[1], [0], [0], [1], [0, 0, 1, 1], [], []>} : vector<64x128xbf16>, vector<128x128xbf16>, vector<64x128xf32> -> vector<64x128xf32>
    %c0_46 = arith.constant 0 : index
    %c0_47 = arith.constant 0 : index
    %59 = vector.load %arg11[%c0_46, %c0_47] : memref<1x128xf32, #tpu.memory_space<vmem>>, vector<1x128xf32>
    %60 = vector.broadcast %59 : vector<1x128xf32> to vector<64x128xf32>
    %61 = arith.addf %58, %60 : vector<64x128xf32>
    %62 = vector.extract_strided_slice %61 {offsets = [0, 0], sizes = [64, 32], strides = [1, 1]} : vector<64x128xf32> to vector<64x32xf32>
    %cst_48 = arith.constant 0.000000e+00 : f32
    %63 = vector.broadcast %cst_48 : f32 to vector<64x32xf32>
    %64 = arith.maximumf %62, %63 : vector<64x32xf32>
    %65 = vector.extract_strided_slice %61 {offsets = [0, 64], sizes = [64, 32], strides = [1, 1]} : vector<64x128xf32> to vector<64x32xf32>
    %66 = vector.extract_strided_slice %61 {offsets = [0, 96], sizes = [64, 32], strides = [1, 1]} : vector<64x128xf32> to vector<64x32xf32>
    %67 = arith.mulf %65, %66 : vector<64x32xf32>
    %cst_49 = arith.constant 0.000000e+00 : f32
    %68 = vector.broadcast %cst_49 : f32 to vector<64x32xf32>
    %69 = arith.maximumf %67, %68 : vector<64x32xf32>
    %70 = vector.extract_strided_slice %61 {offsets = [0, 32], sizes = [64, 32], strides = [1, 1]} : vector<64x128xf32> to vector<64x32xf32>
    %71 = arith.truncf %70 : vector<64x32xf32> to vector<64x32xbf16>
    %cst_50 = arith.constant dense<0.000000e+00> : vector<64x32xf32>
    %72 = tpu.matmul %0, %71, %cst_50 {dimension_numbers = #tpu.dot_dimension_numbers<[1], [0], [0], [1], [0, 0, 1, 1], [], []>} : vector<64x64xbf16>, vector<64x32xbf16>, vector<64x32xf32> -> vector<64x32xf32>
    %c0_51 = arith.constant 0 : index
    %c0_52 = arith.constant 0 : index
    %73 = vector.load %arg12[%c0_51, %c0_52] : memref<1x32xf32, #tpu.memory_space<vmem>>, vector<1x32xf32>
    %74 = vector.broadcast %73 : vector<1x32xf32> to vector<64x32xf32>
    %75 = arith.addf %72, %74 : vector<64x32xf32>
    %cst_53 = arith.constant 0.000000e+00 : f32
    %76 = vector.broadcast %cst_53 : f32 to vector<64x32xf32>
    %77 = arith.maximumf %75, %76 : vector<64x32xf32>
    %c0_54 = arith.constant 0 : index
    %c0_55 = arith.constant 0 : index
    %78 = vector.load %arg18[%c0_54, %c0_55] : memref<64x128xf32, #tpu.memory_space<vmem>>, vector<64x32xf32>
    tpu.vector_store %arg18[%c0_54, %c0_55], %64 {strides = array<i32>} : memref<64x128xf32, #tpu.memory_space<vmem>>, vector<64x32xf32>,
    %c0_56 = arith.constant 0 : index
    %c32_57 = arith.constant 32 : index
    %79 = vector.load %arg18[%c0_56, %c32_57] : memref<64x128xf32, #tpu.memory_space<vmem>>, vector<64x32xf32>
    tpu.vector_store %arg18[%c0_56, %c32_57], %77 {strides = array<i32>} : memref<64x128xf32, #tpu.memory_space<vmem>>, vector<64x32xf32>,
    %c0_58 = arith.constant 0 : index
    %c64_59 = arith.constant 64 : index
    %80 = vector.load %arg18[%c0_58, %c64_59] : memref<64x128xf32, #tpu.memory_space<vmem>>, vector<64x32xf32>
    tpu.vector_store %arg18[%c0_58, %c64_59], %69 {strides = array<i32>} : memref<64x128xf32, #tpu.memory_space<vmem>>, vector<64x32xf32>,
    %c0_60 = arith.constant 0 : index
    %c0_61 = arith.constant 0 : index
    %81 = vector.load %arg2[%c0_60, %c0_61] : memref<2x64xf32, #tpu.memory_space<vmem>>, vector<2x64xf32>
    %c0_62 = arith.constant 0 : index
    %c0_63 = arith.constant 0 : index
    %82 = vector.load %arg18[%c0_62, %c0_63] : memref<64x128xf32, #tpu.memory_space<vmem>>, vector<64x128xf32>
    %cst_64 = arith.constant dense<0.000000e+00> : vector<2x128xf32>
    %83 = tpu.matmul %81, %82, %cst_64 {dimension_numbers = #tpu.dot_dimension_numbers<[1], [0], [0], [1], [0, 0, 1, 1], [], []>} : vector<2x64xf32>, vector<64x128xf32>, vector<2x128xf32> -> vector<2x128xf32>
    %c0_65 = arith.constant 0 : index
    %c0_66 = arith.constant 0 : index
    %84 = vector.load %arg13[%c0_65, %c0_66] : memref<128x32xf32, #tpu.memory_space<vmem>>, vector<128x32xf32>
    %cst_67 = arith.constant dense<0.000000e+00> : vector<2x32xf32>
    %85 = tpu.matmul %83, %84, %cst_67 {dimension_numbers = #tpu.dot_dimension_numbers<[1], [0], [0], [1], [0, 0, 1, 1], [], []>} : vector<2x128xf32>, vector<128x32xf32>, vector<2x32xf32> -> vector<2x32xf32>
    %c0_68 = arith.constant 0 : index
    %c0_69 = arith.constant 0 : index
    %86 = vector.load %arg14[%c0_68, %c0_69] : memref<1x32xf32, #tpu.memory_space<vmem>>, vector<1x32xf32>
    %87 = vector.broadcast %86 : vector<1x32xf32> to vector<2x32xf32>
    %88 = arith.addf %85, %87 : vector<2x32xf32>
    %cst_70 = arith.constant 0.000000e+00 : f32
    %89 = vector.broadcast %cst_70 : f32 to vector<2x32xf32>
    %90 = arith.maximumf %88, %89 : vector<2x32xf32>
    %c0_71 = arith.constant 0 : index
    %c0_72 = arith.constant 0 : index
    %91 = vector.load %arg15[%c0_71, %c0_72] : memref<32x1xf32, #tpu.memory_space<vmem>>, vector<32x1xf32>
    %cst_73 = arith.constant dense<0.000000e+00> : vector<2x1xf32>
    %92 = tpu.matmul %90, %91, %cst_73 {dimension_numbers = #tpu.dot_dimension_numbers<[1], [0], [0], [1], [0, 0, 1, 1], [], []>} : vector<2x32xf32>, vector<32x1xf32>, vector<2x1xf32> -> vector<2x1xf32>
    %c0_74 = arith.constant 0 : index
    %c0_75 = arith.constant 0 : index
    %93 = vector.load %arg16[%c0_74, %c0_75] : memref<1x1xf32, #tpu.memory_space<vmem>>, vector<1x1xf32>
    %94 = vector.broadcast %93 : vector<1x1xf32> to vector<2x1xf32>
    %95 = arith.addf %92, %94 : vector<2x1xf32>
    %c0_76 = arith.constant 0 : index
    %c0_77 = arith.constant 0 : index
    %96 = vector.load %arg17[%c0_76, %c0_77] : memref<2x1xf32, #tpu.memory_space<vmem>>, vector<2x1xf32>
    tpu.vector_store %arg17[%c0_76, %c0_77], %95 {strides = array<i32>} : memref<2x1xf32, #tpu.memory_space<vmem>>, vector<2x1xf32>,
    return
  }
}

</mosaic_0001>

<llo_original>
// kernel: tpu_custom_call.1
$region0: #{tpu_custom_call.1}
  #allocation0 [shape = 'u32[]', space=smem, size = 0x4, offset = 0x4, fixed_abs, tag = 'smem constant byte address 0x4 - core index']
  #allocation1 [shape = 'u32[144,128]{1,0:T(1,128)}', space=vmem, size = 0x12000, scoped, tag = 'internal scratch']
  #allocation2 [shape = 'f32[64,128]{1,0:T(8,128)}', space=vmem, size = 0x8000, scoped, tag = 'scratch operand']
  #allocation3 [shape = 'f32[1,1]{1,0:T(1,128)S(1)}', space=vmem, size = 0x200, scoped, tag = 'scoped memory for tpu_custom_call.1']
  %s0 = inlined_call_operand.vmem [shape: bf16[64,4], index: 0, kind: input, shape index: {}]
  %s1 = inlined_call_operand.vmem [shape: bf16[64,64], index: 1, kind: input, shape index: {}]
  %s2 = inlined_call_operand.vmem [shape: f32[2,64], index: 2, kind: input, shape index: {}]
  %s3 = inlined_call_operand.vmem [shape: bf16[4,128], index: 3, kind: input, shape index: {}]
  %s4 = inlined_call_operand.vmem [shape: f32[1,128], index: 4, kind: input, shape index: {}]
  %s5 = inlined_call_operand.vmem [shape: bf16[4,32], index: 5, kind: input, shape index: {}]
  %s6 = inlined_call_operand.vmem [shape: f32[1,32], index: 6, kind: input, shape index: {}]
  %s7 = inlined_call_operand.vmem [shape: bf16[128,128], index: 7, kind: input, shape index: {}]
  %s8 = inlined_call_operand.vmem [shape: f32[1,128], index: 8, kind: input, shape index: {}]
  %s9 = inlined_call_operand.vmem [shape: f32[1,32], index: 9, kind: input, shape index: {}]
  %s10 = inlined_call_operand.vmem [shape: bf16[128,128], index: 10, kind: input, shape index: {}]
  %s11 = inlined_call_operand.vmem [shape: f32[1,128], index: 11, kind: input, shape index: {}]
  %s12 = inlined_call_operand.vmem [shape: f32[1,32], index: 12, kind: input, shape index: {}]
  %s13 = inlined_call_operand.vmem [shape: f32[128,32], index: 13, kind: input, shape index: {}]
  %s14 = inlined_call_operand.vmem [shape: f32[1,32], index: 14, kind: input, shape index: {}]
  %s15 = inlined_call_operand.vmem [shape: f32[32,1], index: 15, kind: input, shape index: {}]
  %s16 = inlined_call_operand.<no memory space> [shape: f32[1,1], index: 16, kind: input, shape index: {}]
  %s17 = inlined_call_operand.vmem [shape: f32[2,1], index: 17, kind: output, shape index: {}]
  %s18 = sld [smem:[#allocation0]]
  $region78: #{tpu_custom_call.1} parent=0
    _
  %s20 = ssub.s32 1, %s18
  %s21 = scalar_select 0, %s20, %s18
  %v22 = vstv %s16
  %23 = vst [vmem:[#allocation3] sm:$0x1] %v22
  // Predicated region
  $region2: #{tpu_custom_call.1} parent=0 // pred_check
    _
  $region3: #{tpu_custom_call.1} parent=0 // pred_check_branch
    %25 = sbr.rel (0) target = $region5
  $region4: #{tpu_custom_call.1} parent=0 // pred_region
    _
  $region5: #{tpu_custom_call.1} parent=0 // pred_fallthru
    _
  // Predicated region
  $region6: #{tpu_custom_call.1} parent=0 // pred_check
    _
  $region7: #{tpu_custom_call.1} parent=0 // pred_check_branch
    %27 = sbr.rel (0) target = $region9
  $region8: #{tpu_custom_call.1} parent=0 // pred_region
    _
  $region9: #{tpu_custom_call.1} parent=0 // pred_fallthru
    _
  // Predicated region
  $region10: #{tpu_custom_call.1} parent=0 // pred_check
    _
  $region11: #{tpu_custom_call.1} parent=0 // pred_check_branch
    %29 = sbr.rel (0) target = $region13
  $region12: #{tpu_custom_call.1} parent=0 // pred_region
    _
  $region13: #{tpu_custom_call.1} parent=0 // pred_fallthru
    _
  // Predicated region
  $region14: #{tpu_custom_call.1} parent=0 // pred_check
    _
  $region15: #{tpu_custom_call.1} parent=0 // pred_check_branch
    %31 = sbr.rel (0) target = $region17
  $region16: #{tpu_custom_call.1} parent=0 // pred_region
    _
  $region17: #{tpu_custom_call.1} parent=0 // pred_fallthru
    _
  // Predicated region
  $region18: #{tpu_custom_call.1} parent=0 // pred_check
    _
  $region19: #{tpu_custom_call.1} parent=0 // pred_check_branch
    %33 = sbr.rel (0) target = $region21
  $region20: #{tpu_custom_call.1} parent=0 // pred_region
    _
  $region21: #{tpu_custom_call.1} parent=0 // pred_fallthru
    _
  // Predicated region
  $region22: #{tpu_custom_call.1} parent=0 // pred_check
    _
  $region23: #{tpu_custom_call.1} parent=0 // pred_check_branch
    %35 = sbr.rel (0) target = $region25
  $region24: #{tpu_custom_call.1} parent=0 // pred_region
    _
  $region25: #{tpu_custom_call.1} parent=0 // pred_fallthru
    _
  // Predicated region
  $region26: #{tpu_custom_call.1} parent=0 // pred_check
    _
  $region27: #{tpu_custom_call.1} parent=0 // pred_check_branch
    %37 = sbr.rel (0) target = $region29
  $region28: #{tpu_custom_call.1} parent=0 // pred_region
    _
  $region29: #{tpu_custom_call.1} parent=0 // pred_fallthru
    _
  // Predicated region
  $region30: #{tpu_custom_call.1} parent=0 // pred_check
    _
  $region31: #{tpu_custom_call.1} parent=0 // pred_check_branch
    %39 = sbr.rel (0) target = $region33
  $region32: #{tpu_custom_call.1} parent=0 // pred_region
    _
  $region33: #{tpu_custom_call.1} parent=0 // pred_fallthru
    _
  // Predicated region
  $region34: #{tpu_custom_call.1} parent=0 // pred_check
    _
  $region35: #{tpu_custom_call.1} parent=0 // pred_check_branch
    %41 = sbr.rel (0) target = $region37
  $region36: #{tpu_custom_call.1} parent=0 // pred_region
    _
  $region37: #{tpu_custom_call.1} parent=0 // pred_fallthru
    _
  // Predicated region
  $region38: #{tpu_custom_call.1} parent=0 // pred_check
    _
  $region39: #{tpu_custom_call.1} parent=0 // pred_check_branch
    %43 = sbr.rel (0) target = $region41
  $region40: #{tpu_custom_call.1} parent=0 // pred_region
    _
  $region41: #{tpu_custom_call.1} parent=0 // pred_fallthru
    _
  // Predicated region
  $region42: #{tpu_custom_call.1} parent=0 // pred_check
    _
  $region43: #{tpu_custom_call.1} parent=0 // pred_check_branch
    %45 = sbr.rel (0) target = $region45
  $region44: #{tpu_custom_call.1} parent=0 // pred_region
    _
  $region45: #{tpu_custom_call.1} parent=0 // pred_fallthru
    _
  // Predicated region
  $region46: #{tpu_custom_call.1} parent=0 // pred_check
    _
  $region47: #{tpu_custom_call.1} parent=0 // pred_check_branch
    %47 = sbr.rel (0) target = $region49
  $region48: #{tpu_custom_call.1} parent=0 // pred_region
    _
  $region49: #{tpu_custom_call.1} parent=0 // pred_fallthru
    _
  // Predicated region
  $region50: #{tpu_custom_call.1} parent=0 // pred_check
    _
  $region51: #{tpu_custom_call.1} parent=0 // pred_check_branch
    %49 = sbr.rel (0) target = $region53
  $region52: #{tpu_custom_call.1} parent=0 // pred_region
    _
  $region53: #{tpu_custom_call.1} parent=0 // pred_fallthru
    _
  // Predicated region
  $region54: #{tpu_custom_call.1} parent=0 // pred_check
    _
  $region55: #{tpu_custom_call.1} parent=0 // pred_check_branch
    %51 = sbr.rel (0) target = $region57
  $region56: #{tpu_custom_call.1} parent=0 // pred_region
    _
  $region57: #{tpu_custom_call.1} parent=0 // pred_fallthru
    _
  // Predicated region
  $region58: #{tpu_custom_call.1} parent=0 // pred_check
    _
  $region59: #{tpu_custom_call.1} parent=0 // pred_check_branch
    %53 = sbr.rel (0) target = $region61
  $region60: #{tpu_custom_call.1} parent=0 // pred_region
    _
  $region61: #{tpu_custom_call.1} parent=0 // pred_fallthru
    _
  // Predicated region
  $region62: #{tpu_custom_call.1} parent=0 // pred_check
    _
  $region63: #{tpu_custom_call.1} parent=0 // pred_check_branch
    %55 = sbr.rel (0) target = $region65
  $region64: #{tpu_custom_call.1} parent=0 // pred_region
    _
  $region65: #{tpu_custom_call.1} parent=0 // pred_fallthru
    _
  // Predicated region
  $region66: #{tpu_custom_call.1} parent=0 // pred_check
    _
  $region67: #{tpu_custom_call.1} parent=0 // pred_check_branch
    %57 = sbr.rel (0) target = $region69
  $region68: #{tpu_custom_call.1} parent=0 // pred_region
    _
  $region69: #{tpu_custom_call.1} parent=0 // pred_fallthru
    _
  %v59 = vld [vmem:[%s1] sm:$0xf]
  %v60 = vld [vmem:[%s1 + $0x4] sm:$0xf]
  %v61 = vld [vmem:[%s1 + $0x8] sm:$0xf]
  %v62 = vld [vmem:[%s1 + $0xc] sm:$0xf]
  %v63 = vld [vmem:[%s1 + $0x10] sm:$0xf]
  %v64 = vld [vmem:[%s1 + $0x14] sm:$0xf]
  %v65 = vld [vmem:[%s1 + $0x18] sm:$0xf]
  %v66 = vld [vmem:[%s1 + $0x1c] sm:$0xf]
  %v67 = vld [vmem:[%s0] sm:$0xf]
  %v68 = vld [vmem:[%s0 + $0x4] sm:$0xf]
  %v69 = vld [vmem:[%s0 + $0x8] sm:$0xf]
  %v70 = vld [vmem:[%s0 + $0xc] sm:$0xf]
  %v71 = vld [vmem:[%s0 + $0x10] sm:$0xf]
  %v72 = vld [vmem:[%s0 + $0x14] sm:$0xf]
  %v73 = vld [vmem:[%s0 + $0x18] sm:$0xf]
  %v74 = vld [vmem:[%s0 + $0x1c] sm:$0xf]
  %v75 = vld [vmem:[%s3] sm:$0x3]
  %v76 = vld [vmem:[%s4] sm:$0x1]
  %v78 = vlaneseq
  %v79 = vshrl.u32 %v78, 7
  %v80 = vsub.s32 0, %v79
  %v81 = vrot.slane %v76, %v80
  %v91 = vunpack.c.l.b16 %v67
  %v92 = vunpack.c.l.b16 %v68
  %v93 = vunpack.c.l.b16 %v69
  %v94 = vunpack.c.l.b16 %v70
  %v95 = vunpack.c.l.b16 %v71
  %v96 = vunpack.c.l.b16 %v72
  %v97 = vunpack.c.l.b16 %v73
  %v98 = vunpack.c.l.b16 %v74
  %v99 = vpack.c.b16 %v92, %v91
  %v100 = vpack.c.b16 %v94, %v93
  %v101 = vpack.c.b16 %v96, %v95
  %v102 = vpack.c.b16 %v98, %v97
  %vm103 = vcmask 31744
  %v105 = vsel %vm103, %v99, 0
  %v108 = vsel %vm103, %v100, 0
  %v111 = vsel %vm103, %v101, 0
  %v114 = vsel %vm103, %v102, 0
  %vm116 = vcmask 1041408
  %v118 = vsel %vm116, %v75, 0
  %120 = vmatprep.subr.bf16.mxu0 0
  %121 = vmatpush1.bf16.msra.mxu0 %v118
  %122 = vmatprep.subr.bf16.mxu0 0
  %123 = vmatpush1.bf16.msra.mxu0 0
  %124 = vmatprep.subr.bf16.mxu0 0
  %125 = vmatpush1.bf16.msra.mxu0 0
  %126 = vmatprep.subr.bf16.mxu0 0
  %127 = vmatpush1.bf16.msra.mxu0 0
  %128 = vmatprep.subr.bf16.mxu0 0
  %129 = vmatpush1.bf16.msra.mxu0 0
  %130 = vmatprep.subr.bf16.mxu0 0
  %131 = vmatpush1.bf16.msra.mxu0 0
  %132 = vmatprep.subr.bf16.mxu0 0
  %133 = vmatpush1.bf16.msra.mxu0 0
  %134 = vmatprep.subr.bf16.mxu0 0
  %135 = vmatpush1.bf16.msra.mxu0 0
  %136 = vmatprep.subr.bf16.mxu0 0
  %137 = vmatpush1.bf16.msra.mxu0 0
  %138 = vmatprep.subr.bf16.mxu0 0
  %139 = vmatpush1.bf16.msra.mxu0 0
  %140 = vmatprep.subr.bf16.mxu0 0
  %141 = vmatpush1.bf16.msra.mxu0 0
  %142 = vmatprep.subr.bf16.mxu0 0
  %143 = vmatpush1.bf16.msra.mxu0 0
  %144 = vmatprep.subr.bf16.mxu0 0
  %145 = vmatpush1.bf16.msra.mxu0 0
  %146 = vmatprep.subr.bf16.mxu0 0
  %147 = vmatpush1.bf16.msra.mxu0 0
  %148 = vmatprep.subr.bf16.mxu0 0
  %149 = vmatpush1.bf16.msra.mxu0 0
  %150 = vmatprep.subr.bf16.mxu0 0
  %151 = vmatpush1.bf16.msra.mxu0 0
  %152 = vmatprep.mubr.bf16.mxu0 0
  %153 = vmatmul.mubr.bf16.gmra.mrb[0].mxu0 %v105
  %v154 = vpop.f32.mrb[0].mxu0
  %v155 = vadd.f32 %v81, %v154
  %v156 = vpop.f32.mrb[0].mxu0
  %v157 = vpop.f32.mrb[0].mxu0
  %v158 = vadd.f32 %v81, %v157
  %v159 = vpop.f32.mrb[0].mxu0
  %160 = vmatprep.mubr.bf16.mxu0 0
  %161 = vmatmul.mubr.bf16.gmra.mrb[0].mxu0 %v108
  %v162 = vpop.f32.mrb[0].mxu0
  %v163 = vadd.f32 %v81, %v162
  %v164 = vpop.f32.mrb[0].mxu0
  %v165 = vpop.f32.mrb[0].mxu0
  %v166 = vadd.f32 %v81, %v165
  %v167 = vpop.f32.mrb[0].mxu0
  %168 = vmatprep.mubr.bf16.mxu0 0
  %169 = vmatmul.mubr.bf16.gmra.mrb[0].mxu0 %v111
  %v170 = vpop.f32.mrb[0].mxu0
  %v171 = vadd.f32 %v81, %v170
  %v172 = vpop.f32.mrb[0].mxu0
  %v173 = vpop.f32.mrb[0].mxu0
  %v174 = vadd.f32 %v81, %v173
  %v175 = vpop.f32.mrb[0].mxu0
  %176 = vmatprep.mubr.bf16.mxu0 0
  %177 = vmatmul.mubr.bf16.gmra.mrb[0].mxu0 %v114
  %v178 = vpop.f32.mrb[0].mxu0
  %v179 = vadd.f32 %v81, %v178
  %v180 = vpop.f32.mrb[0].mxu0
  %v181 = vpop.f32.mrb[0].mxu0
  %v182 = vadd.f32 %v81, %v181
  %v183 = vpop.f32.mrb[0].mxu0
  %184 = vdwg.mxu0
  %v185 = vmax.f32 %v155, 0.0
  %v186 = vmax.f32 %v158, 0.0
  %v187 = vmax.f32 %v163, 0.0
  %v188 = vmax.f32 %v166, 0.0
  %v189 = vmax.f32 %v171, 0.0
  %v190 = vmax.f32 %v174, 0.0
  %v191 = vmax.f32 %v179, 0.0
  %v192 = vmax.f32 %v182, 0.0
  %201 = vrot.lane.b32.xlu0 %v155, 96
  %v202 = vpop.permute.xlu0 %201
  %203 = vrot.lane.b32.xlu0 %v158, 96
  %v204 = vpop.permute.xlu0 %203
  %205 = vrot.lane.b32.xlu0 %v163, 96
  %v206 = vpop.permute.xlu0 %205
  %207 = vrot.lane.b32.xlu0 %v166, 96
  %v208 = vpop.permute.xlu0 %207
  %209 = vrot.lane.b32.xlu0 %v171, 96
  %v210 = vpop.permute.xlu0 %209
  %211 = vrot.lane.b32.xlu0 %v174, 96
  %v212 = vpop.permute.xlu0 %211
  %213 = vrot.lane.b32.xlu0 %v179, 96
  %v214 = vpop.permute.xlu0 %213
  %215 = vrot.lane.b32.xlu0 %v182, 96
  %v216 = vpop.permute.xlu0 %215
  %v225 = vmul.f32 %v155, %v202
  %v226 = vmul.f32 %v158, %v204
  %v227 = vmul.f32 %v163, %v206
  %v228 = vmul.f32 %v166, %v208
  %v229 = vmul.f32 %v171, %v210
  %v230 = vmul.f32 %v174, %v212
  %v231 = vmul.f32 %v179, %v214
  %v232 = vmul.f32 %v182, %v216
  %v233 = vmax.f32 %v225, 0.0
  %v234 = vmax.f32 %v226, 0.0
  %v235 = vmax.f32 %v227, 0.0
  %v236 = vmax.f32 %v228, 0.0
  %v237 = vmax.f32 %v229, 0.0
  %v238 = vmax.f32 %v230, 0.0
  %v239 = vmax.f32 %v231, 0.0
  %v240 = vmax.f32 %v232, 0.0
  %v249 = vunpack.c.l.b16 %v59
  %v250 = vunpack.c.l.b16 %v60
  %v251 = vunpack.c.l.b16 %v61
  %v252 = vunpack.c.l.b16 %v62
  %v253 = vunpack.c.l.b16 %v63
  %v254 = vunpack.c.l.b16 %v64
  %v255 = vunpack.c.l.b16 %v65
  %v256 = vunpack.c.l.b16 %v66
  %v257 = vpack.c.b16 %v250, %v249
  %v258 = vpack.c.b16 %v252, %v251
  %v259 = vpack.c.b16 %v254, %v253
  %v260 = vpack.c.b16 %v256, %v255
  %vm265 = vcmask 523264
  %v267 = vsel %vm265, %v257, 0
  %v270 = vsel %vm265, %v258, 0
  %v273 = vsel %vm265, %v259, 0
  %v276 = vsel %vm265, %v260, 0
  %278 = vmatprep.subr.bf16.mxu0 0
  %279 = vmatpush1.bf16.msra.mxu0 %v99
  %280 = vmatprep.subr.bf16.mxu0 0
  %281 = vmatpush1.bf16.msra.mxu0 %v100
  %282 = vmatprep.subr.bf16.mxu0 0
  %283 = vmatpush1.bf16.msra.mxu0 %v101
  %284 = vmatprep.subr.bf16.mxu0 0
  %285 = vmatpush1.bf16.msra.mxu0 %v102
  %286 = vmatprep.subr.bf16.mxu0 0
  %287 = vmatpush1.bf16.msra.mxu0 0
  %288 = vmatprep.subr.bf16.mxu0 0
  %289 = vmatpush1.bf16.msra.mxu0 0
  %290 = vmatprep.subr.bf16.mxu0 0
  %291 = vmatpush1.bf16.msra.mxu0 0
  %292 = vmatprep.subr.bf16.mxu0 0
  %293 = vmatpush1.bf16.msra.mxu0 0
  %294 = vmatprep.subr.bf16.mxu0 0
  %295 = vmatpush1.bf16.msra.mxu0 0
  %296 = vmatprep.subr.bf16.mxu0 0
  %297 = vmatpush1.bf16.msra.mxu0 0
  %298 = vmatprep.subr.bf16.mxu0 0
  %299 = vmatpush1.bf16.msra.mxu0 0
  %300 = vmatprep.subr.bf16.mxu0 0
  %301 = vmatpush1.bf16.msra.mxu0 0
  %302 = vmatprep.subr.bf16.mxu0 0
  %303 = vmatpush1.bf16.msra.mxu0 0
  %304 = vmatprep.subr.bf16.mxu0 0
  %305 = vmatpush1.bf16.msra.mxu0 0
  %306 = vmatprep.subr.bf16.mxu0 0
  %307 = vmatpush1.bf16.msra.mxu0 0
  %308 = vmatprep.subr.bf16.mxu0 0
  %309 = vmatpush1.bf16.msra.mxu0 0
  %310 = vmatprep.mubr.bf16.mxu0 0
  %311 = vmatmul.mubr.bf16.gmra.mrb[0].mxu0 %v267
  %v312 = vpop.f32.mrb[0].mxu0
  %v313 = vadd.f32 0.0, %v312
  %v314 = vpop.f32.mrb[0].mxu0
  %v315 = vpop.f32.mrb[0].mxu0
  %v316 = vadd.f32 0.0, %v315
  %v317 = vpop.f32.mrb[0].mxu0
  %318 = vmatprep.mubr.bf16.mxu0 0
  %319 = vmatmul.mubr.bf16.gmra.mrb[0].mxu0 %v270
  %v320 = vpop.f32.mrb[0].mxu0
  %v321 = vadd.f32 0.0, %v320
  %v322 = vpop.f32.mrb[0].mxu0
  %v323 = vpop.f32.mrb[0].mxu0
  %v324 = vadd.f32 0.0, %v323
  %v325 = vpop.f32.mrb[0].mxu0
  %326 = vmatprep.mubr.bf16.mxu0 0
  %327 = vmatmul.mubr.bf16.gmra.mrb[0].mxu0 %v273
  %v328 = vpop.f32.mrb[0].mxu0
  %v329 = vadd.f32 0.0, %v328
  %v330 = vpop.f32.mrb[0].mxu0
  %v331 = vpop.f32.mrb[0].mxu0
  %v332 = vadd.f32 0.0, %v331
  %v333 = vpop.f32.mrb[0].mxu0
  %334 = vmatprep.mubr.bf16.mxu0 0
  %335 = vmatmul.mubr.bf16.gmra.mrb[0].mxu0 %v276
  %v336 = vpop.f32.mrb[0].mxu0
  %v337 = vadd.f32 0.0, %v336
  %v338 = vpop.f32.mrb[0].mxu0
  %v339 = vpop.f32.mrb[0].mxu0
  %v340 = vadd.f32 0.0, %v339
  %v341 = vpop.f32.mrb[0].mxu0
  %342 = vdwg.mxu0
  %v343 = vpack.c.bf16 %v316, %v313
  %v344 = vpack.c.bf16 %v324, %v321
  %v345 = vpack.c.bf16 %v332, %v329
  %v346 = vpack.c.bf16 %v340, %v337
  %v347 = vld [vmem:[%s5] sm:$0x3]
  %v348 = vld [vmem:[%s6] sm:$0x1]
  %v350 = vlaneseq
  %v351 = vshrl.u32 %v350, 7
  %v352 = vsub.s32 0, %v351
  %v353 = vrot.slane %v348, %v352
  %v356 = vsel %vm103, %v343, 0
  %v359 = vsel %vm103, %v344, 0
  %v362 = vsel %vm103, %v345, 0
  %v365 = vsel %vm103, %v346, 0
  %v368 = vsel %vm116, %v347, 0
  %370 = vmatprep.subr.bf16.mxu0 0
  %371 = vmatpush1.bf16.msra.mxu0 %v368
  %372 = vmatprep.subr.bf16.mxu0 0
  %373 = vmatpush1.bf16.msra.mxu0 0
  %374 = vmatprep.subr.bf16.mxu0 0
  %375 = vmatpush1.bf16.msra.mxu0 0
  %376 = vmatprep.subr.bf16.mxu0 0
  %377 = vmatpush1.bf16.msra.mxu0 0
  %378 = vmatprep.subr.bf16.mxu0 0
  %379 = vmatpush1.bf16.msra.mxu0 0
  %380 = vmatprep.subr.bf16.mxu0 0
  %381 = vmatpush1.bf16.msra.mxu0 0
  %382 = vmatprep.subr.bf16.mxu0 0
  %383 = vmatpush1.bf16.msra.mxu0 0
  %384 = vmatprep.subr.bf16.mxu0 0
  %385 = vmatpush1.bf16.msra.mxu0 0
  %386 = vmatprep.subr.bf16.mxu0 0
  %387 = vmatpush1.bf16.msra.mxu0 0
  %388 = vmatprep.subr.bf16.mxu0 0
  %389 = vmatpush1.bf16.msra.mxu0 0
  %390 = vmatprep.subr.bf16.mxu0 0
  %391 = vmatpush1.bf16.msra.mxu0 0
  %392 = vmatprep.subr.bf16.mxu0 0
  %393 = vmatpush1.bf16.msra.mxu0 0
  %394 = vmatprep.subr.bf16.mxu0 0
  %395 = vmatpush1.bf16.msra.mxu0 0
  %396 = vmatprep.subr.bf16.mxu0 0
  %397 = vmatpush1.bf16.msra.mxu0 0
  %398 = vmatprep.subr.bf16.mxu0 0
  %399 = vmatpush1.bf16.msra.mxu0 0
  %400 = vmatprep.subr.bf16.mxu0 0
  %401 = vmatpush1.bf16.msra.mxu0 0
  %402 = vmatprep.mubr.bf16.mxu0 0
  %403 = vmatmul.mubr.bf16.gmra.mrb[0].mxu0 %v356
  %v404 = vpop.f32.mrb[0].mxu0
  %v405 = vadd.f32 %v353, %v404
  %v406 = vpop.f32.mrb[0].mxu0
  %v407 = vpop.f32.mrb[0].mxu0
  %v408 = vadd.f32 %v353, %v407
  %v409 = vpop.f32.mrb[0].mxu0
  %410 = vmatprep.mubr.bf16.mxu0 0
  %411 = vmatmul.mubr.bf16.gmra.mrb[0].mxu0 %v359
  %v412 = vpop.f32.mrb[0].mxu0
  %v413 = vadd.f32 %v353, %v412
  %v414 = vpop.f32.mrb[0].mxu0
  %v415 = vpop.f32.mrb[0].mxu0
  %v416 = vadd.f32 %v353, %v415
  %v417 = vpop.f32.mrb[0].mxu0
  %418 = vmatprep.mubr.bf16.mxu0 0
  %419 = vmatmul.mubr.bf16.gmra.mrb[0].mxu0 %v362
  %v420 = vpop.f32.mrb[0].mxu0
  %v421 = vadd.f32 %v353, %v420
  %v422 = vpop.f32.mrb[0].mxu0
  %v423 = vpop.f32.mrb[0].mxu0
  %v424 = vadd.f32 %v353, %v423
  %v425 = vpop.f32.mrb[0].mxu0
  %426 = vmatprep.mubr.bf16.mxu0 0
  %427 = vmatmul.mubr.bf16.gmra.mrb[0].mxu0 %v365
  %v428 = vpop.f32.mrb[0].mxu0
  %v429 = vadd.f32 %v353, %v428
  %v430 = vpop.f32.mrb[0].mxu0
  %v431 = vpop.f32.mrb[0].mxu0
  %v432 = vadd.f32 %v353, %v431
  %v433 = vpop.f32.mrb[0].mxu0
  %434 = vdwg.mxu0
  %v435 = vmax.f32 %v405, 0.0
  %v436 = vmax.f32 %v408, 0.0
  %v437 = vmax.f32 %v413, 0.0
  %v438 = vmax.f32 %v416, 0.0
  %v439 = vmax.f32 %v421, 0.0
  %v440 = vmax.f32 %v424, 0.0
  %v441 = vmax.f32 %v429, 0.0
  %v442 = vmax.f32 %v432, 0.0
  %vm443 = vcmask 1048320
  %444 = vst.msk [vmem:[#allocation2] sm:$0xff] %vm443, 0.0
  %445 = vst.msk [vmem:[#allocation2 + $0x8] sm:$0xff] %vm443, 0.0
  %446 = vst.msk [vmem:[#allocation2 + $0x10] sm:$0xff] %vm443, 0.0
  %447 = vst.msk [vmem:[#allocation2 + $0x18] sm:$0xff] %vm443, 0.0
  %448 = vst.msk [vmem:[#allocation2 + $0x20] sm:$0xff] %vm443, 0.0
  %449 = vst.msk [vmem:[#allocation2 + $0x28] sm:$0xff] %vm443, 0.0
  %450 = vst.msk [vmem:[#allocation2 + $0x30] sm:$0xff] %vm443, 0.0
  %451 = vst.msk [vmem:[#allocation2 + $0x38] sm:$0xff] %vm443, 0.0
  %vm452 = vcmask 261120
  %453 = vst.msk [vmem:[#allocation2] sm:$0xff] %vm452, %v185
  %454 = vst.msk [vmem:[#allocation2 + $0x8] sm:$0xff] %vm452, %v186
  %455 = vst.msk [vmem:[#allocation2 + $0x10] sm:$0xff] %vm452, %v187
  %456 = vst.msk [vmem:[#allocation2 + $0x18] sm:$0xff] %vm452, %v188
  %457 = vst.msk [vmem:[#allocation2 + $0x20] sm:$0xff] %vm452, %v189
  %458 = vst.msk [vmem:[#allocation2 + $0x28] sm:$0xff] %vm452, %v190
  %459 = vst.msk [vmem:[#allocation2 + $0x30] sm:$0xff] %vm452, %v191
  %460 = vst.msk [vmem:[#allocation2 + $0x38] sm:$0xff] %vm452, %v192
  %469 = vrot.lane.b32.xlu0 %v435, 32
  %v470 = vpop.permute.xlu0 %469
  %471 = vrot.lane.b32.xlu0 %v436, 32
  %v472 = vpop.permute.xlu0 %471
  %473 = vrot.lane.b32.xlu0 %v437, 32
  %v474 = vpop.permute.xlu0 %473
  %475 = vrot.lane.b32.xlu0 %v438, 32
  %v476 = vpop.permute.xlu0 %475
  %477 = vrot.lane.b32.xlu0 %v439, 32
  %v478 = vpop.permute.xlu0 %477
  %479 = vrot.lane.b32.xlu0 %v440, 32
  %v480 = vpop.permute.xlu0 %479
  %481 = vrot.lane.b32.xlu0 %v441, 32
  %v482 = vpop.permute.xlu0 %481
  %483 = vrot.lane.b32.xlu0 %v442, 32
  %v484 = vpop.permute.xlu0 %483
  %vm493 = vcmask 523520
  %494 = vst.msk [vmem:[#allocation2] sm:$0xff] %vm493, %v470
  %495 = vst.msk [vmem:[#allocation2 + $0x8] sm:$0xff] %vm493, %v472
  %496 = vst.msk [vmem:[#allocation2 + $0x10] sm:$0xff] %vm493, %v474
  %497 = vst.msk [vmem:[#allocation2 + $0x18] sm:$0xff] %vm493, %v476
  %498 = vst.msk [vmem:[#allocation2 + $0x20] sm:$0xff] %vm493, %v478
  %499 = vst.msk [vmem:[#allocation2 + $0x28] sm:$0xff] %vm493, %v480
  %500 = vst.msk [vmem:[#allocation2 + $0x30] sm:$0xff] %vm493, %v482
  %501 = vst.msk [vmem:[#allocation2 + $0x38] sm:$0xff] %vm493, %v484
  %vm502 = vcmask 785920
  %503 = vst.msk [vmem:[#allocation2] sm:$0xff] %vm502, %v233
  %504 = vst.msk [vmem:[#allocation2 + $0x8] sm:$0xff] %vm502, %v234
  %505 = vst.msk [vmem:[#allocation2 + $0x10] sm:$0xff] %vm502, %v235
  %506 = vst.msk [vmem:[#allocation2 + $0x18] sm:$0xff] %vm502, %v236
  %507 = vst.msk [vmem:[#allocation2 + $0x20] sm:$0xff] %vm502, %v237
  %508 = vst.msk [vmem:[#allocation2 + $0x28] sm:$0xff] %vm502, %v238
  %509 = vst.msk [vmem:[#allocation2 + $0x30] sm:$0xff] %vm502, %v239
  %510 = vst.msk [vmem:[#allocation2 + $0x38] sm:$0xff] %vm502, %v240
  %v511 = vld [vmem:[#allocation2] sm:$0xff]
  %v512 = vld [vmem:[#allocation2 + $0x8] sm:$0xff]
  %v513 = vld [vmem:[#allocation2 + $0x10] sm:$0xff]
  %v514 = vld [vmem:[#allocation2 + $0x18] sm:$0xff]
  %v515 = vld [vmem:[#allocation2 + $0x20] sm:$0xff]
  %v516 = vld [vmem:[#allocation2 + $0x28] sm:$0xff]
  %v517 = vld [vmem:[#allocation2 + $0x30] sm:$0xff]
  %v518 = vld [vmem:[#allocation2 + $0x38] sm:$0xff]
  %v519 = vpack.c.bf16 %v512, %v511
  %v520 = vpack.c.bf16 %v514, %v513
  %v521 = vpack.c.bf16 %v516, %v515
  %v522 = vpack.c.bf16 %v518, %v517
  %v523 = vld [vmem:[%s7] sm:$0xf]
  %v524 = vld [vmem:[%s7 + $0x4] sm:$0xf]
  %v525 = vld [vmem:[%s7 + $0x8] sm:$0xf]
  %v526 = vld [vmem:[%s7 + $0xc] sm:$0xf]
  %v527 = vld [vmem:[%s7 + $0x10] sm:$0xf]
  %v528 = vld [vmem:[%s7 + $0x14] sm:$0xf]
  %v529 = vld [vmem:[%s7 + $0x18] sm:$0xf]
  %v530 = vld [vmem:[%s7 + $0x1c] sm:$0xf]
  %v531 = vld [vmem:[%s7 + $0x20] sm:$0xf]
  %v532 = vld [vmem:[%s7 + $0x24] sm:$0xf]
  %v533 = vld [vmem:[%s7 + $0x28] sm:$0xf]
  %v534 = vld [vmem:[%s7 + $0x2c] sm:$0xf]
  %v535 = vld [vmem:[%s7 + $0x30] sm:$0xf]
  %v536 = vld [vmem:[%s7 + $0x34] sm:$0xf]
  %v537 = vld [vmem:[%s7 + $0x38] sm:$0xf]
  %v538 = vld [vmem:[%s7 + $0x3c] sm:$0xf]
  %v539 = vld [vmem:[%s8] sm:$0x1]
  %v541 = vlaneseq
  %v542 = vshrl.u32 %v541, 7
  %v543 = vsub.s32 0, %v542
  %v544 = vrot.slane %v539, %v543
  %v562 = vunpack.c.l.b16 %v523
  %v563 = vunpack.c.l.b16 %v524
  %v564 = vunpack.c.l.b16 %v525
  %v565 = vunpack.c.l.b16 %v526
  %v566 = vunpack.c.l.b16 %v527
  %v567 = vunpack.c.l.b16 %v528
  %v568 = vunpack.c.l.b16 %v529
  %v569 = vunpack.c.l.b16 %v530
  %v570 = vunpack.c.l.b16 %v531
  %v571 = vunpack.c.l.b16 %v532
  %v572 = vunpack.c.l.b16 %v533
  %v573 = vunpack.c.l.b16 %v534
  %v574 = vunpack.c.l.b16 %v535
  %v575 = vunpack.c.l.b16 %v536
  %v576 = vunpack.c.l.b16 %v537
  %v577 = vunpack.c.l.b16 %v538
  %v578 = vpack.c.b16 %v563, %v562
  %v579 = vpack.c.b16 %v565, %v564
  %v580 = vpack.c.b16 %v567, %v566
  %v581 = vpack.c.b16 %v569, %v568
  %v582 = vpack.c.b16 %v571, %v570
  %v583 = vpack.c.b16 %v573, %v572
  %v584 = vpack.c.b16 %v575, %v574
  %v585 = vpack.c.b16 %v577, %v576
  %594 = vmatprep.subr.bf16.mxu0 0
  %595 = vmatpush1.bf16.msra.mxu0 %v578
  %596 = vmatprep.subr.bf16.mxu0 0
  %597 = vmatpush1.bf16.msra.mxu0 %v579
  %598 = vmatprep.subr.bf16.mxu0 0
  %599 = vmatpush1.bf16.msra.mxu0 %v580
  %600 = vmatprep.subr.bf16.mxu0 0
  %601 = vmatpush1.bf16.msra.mxu0 %v581
  %602 = vmatprep.subr.bf16.mxu0 0
  %603 = vmatpush1.bf16.msra.mxu0 %v582
  %604 = vmatprep.subr.bf16.mxu0 0
  %605 = vmatpush1.bf16.msra.mxu0 %v583
  %606 = vmatprep.subr.bf16.mxu0 0
  %607 = vmatpush1.bf16.msra.mxu0 %v584
  %608 = vmatprep.subr.bf16.mxu0 0
  %609 = vmatpush1.bf16.msra.mxu0 %v585
  %610 = vmatprep.subr.bf16.mxu0 0
  %611 = vmatpush1.bf16.msra.mxu0 0
  %612 = vmatprep.subr.bf16.mxu0 0
  %613 = vmatpush1.bf16.msra.mxu0 0
  %614 = vmatprep.subr.bf16.mxu0 0
  %615 = vmatpush1.bf16.msra.mxu0 0
  %616 = vmatprep.subr.bf16.mxu0 0
  %617 = vmatpush1.bf16.msra.mxu0 0
  %618 = vmatprep.subr.bf16.mxu0 0
  %619 = vmatpush1.bf16.msra.mxu0 0
  %620 = vmatprep.subr.bf16.mxu0 0
  %621 = vmatpush1.bf16.msra.mxu0 0
  %622 = vmatprep.subr.bf16.mxu0 0
  %623 = vmatpush1.bf16.msra.mxu0 0
  %624 = vmatprep.subr.bf16.mxu0 0
  %625 = vmatpush1.bf16.msra.mxu0 0
  %626 = vmatprep.mubr.bf16.mxu0 0
  %627 = vmatmul.mubr.bf16.gmra.mrb[0].mxu0 %v519
  %v628 = vpop.f32.mrb[0].mxu0
  %v629 = vadd.f32 %v544, %v628
  %v630 = vpop.f32.mrb[0].mxu0
  %v631 = vpop.f32.mrb[0].mxu0
  %v632 = vadd.f32 %v544, %v631
  %v633 = vpop.f32.mrb[0].mxu0
  %634 = vmatprep.mubr.bf16.mxu0 0
  %635 = vmatmul.mubr.bf16.gmra.mrb[0].mxu0 %v520
  %v636 = vpop.f32.mrb[0].mxu0
  %v637 = vadd.f32 %v544, %v636
  %v638 = vpop.f32.mrb[0].mxu0
  %v639 = vpop.f32.mrb[0].mxu0
  %v640 = vadd.f32 %v544, %v639
  %v641 = vpop.f32.mrb[0].mxu0
  %642 = vmatprep.mubr.bf16.mxu0 0
  %643 = vmatmul.mubr.bf16.gmra.mrb[0].mxu0 %v521
  %v644 = vpop.f32.mrb[0].mxu0
  %v645 = vadd.f32 %v544, %v644
  %v646 = vpop.f32.mrb[0].mxu0
  %v647 = vpop.f32.mrb[0].mxu0
  %v648 = vadd.f32 %v544, %v647
  %v649 = vpop.f32.mrb[0].mxu0
  %650 = vmatprep.mubr.bf16.mxu0 0
  %651 = vmatmul.mubr.bf16.gmra.mrb[0].mxu0 %v522
  %v652 = vpop.f32.mrb[0].mxu0
  %v653 = vadd.f32 %v544, %v652
  %v654 = vpop.f32.mrb[0].mxu0
  %v655 = vpop.f32.mrb[0].mxu0
  %v656 = vadd.f32 %v544, %v655
  %v657 = vpop.f32.mrb[0].mxu0
  %658 = vdwg.mxu0
  %v659 = vmax.f32 %v629, 0.0
  %v660 = vmax.f32 %v632, 0.0
  %v661 = vmax.f32 %v637, 0.0
  %v662 = vmax.f32 %v640, 0.0
  %v663 = vmax.f32 %v645, 0.0
  %v664 = vmax.f32 %v648, 0.0
  %v665 = vmax.f32 %v653, 0.0
  %v666 = vmax.f32 %v656, 0.0
  %675 = vrot.lane.b32.xlu0 %v629, 96
  %v676 = vpop.permute.xlu0 %675
  %677 = vrot.lane.b32.xlu0 %v632, 96
  %v678 = vpop.permute.xlu0 %677
  %679 = vrot.lane.b32.xlu0 %v637, 96
  %v680 = vpop.permute.xlu0 %679
  %681 = vrot.lane.b32.xlu0 %v640, 96
  %v682 = vpop.permute.xlu0 %681
  %683 = vrot.lane.b32.xlu0 %v645, 96
  %v684 = vpop.permute.xlu0 %683
  %685 = vrot.lane.b32.xlu0 %v648, 96
  %v686 = vpop.permute.xlu0 %685
  %687 = vrot.lane.b32.xlu0 %v653, 96
  %v688 = vpop.permute.xlu0 %687
  %689 = vrot.lane.b32.xlu0 %v656, 96
  %v690 = vpop.permute.xlu0 %689
  %v699 = vmul.f32 %v629, %v676
  %v700 = vmul.f32 %v632, %v678
  %v701 = vmul.f32 %v637, %v680
  %v702 = vmul.f32 %v640, %v682
  %v703 = vmul.f32 %v645, %v684
  %v704 = vmul.f32 %v648, %v686
  %v705 = vmul.f32 %v653, %v688
  %v706 = vmul.f32 %v656, %v690
  %v707 = vmax.f32 %v699, 0.0
  %v708 = vmax.f32 %v700, 0.0
  %v709 = vmax.f32 %v701, 0.0
  %v710 = vmax.f32 %v702, 0.0
  %v711 = vmax.f32 %v703, 0.0
  %v712 = vmax.f32 %v704, 0.0
  %v713 = vmax.f32 %v705, 0.0
  %v714 = vmax.f32 %v706, 0.0
  %v715 = vpack.c.bf16 %v632, %v629
  %v716 = vpack.c.bf16 %v640, %v637
  %v717 = vpack.c.bf16 %v648, %v645
  %v718 = vpack.c.bf16 %v656, %v653
  %v719 = vld [vmem:[%s9] sm:$0x1]
  %v721 = vlaneseq
  %v722 = vshrl.u32 %v721, 7
  %v723 = vsub.s32 0, %v722
  %v724 = vrot.slane %v719, %v723
  %730 = vrot.lane.b32.xlu0 %v715, 96
  %v731 = vpop.permute.xlu0 %730
  %732 = vrot.lane.b32.xlu0 %v716, 96
  %v733 = vpop.permute.xlu0 %732
  %734 = vrot.lane.b32.xlu0 %v717, 96
  %v735 = vpop.permute.xlu0 %734
  %736 = vrot.lane.b32.xlu0 %v718, 96
  %v737 = vpop.permute.xlu0 %736
  %742 = vmatprep.subr.bf16.mxu0 0
  %743 = vmatpush1.bf16.msra.mxu0 %v731
  %744 = vmatprep.subr.bf16.mxu0 0
  %745 = vmatpush1.bf16.msra.mxu0 %v733
  %746 = vmatprep.subr.bf16.mxu0 0
  %747 = vmatpush1.bf16.msra.mxu0 %v735
  %748 = vmatprep.subr.bf16.mxu0 0
  %749 = vmatpush1.bf16.msra.mxu0 %v737
  %750 = vmatprep.subr.bf16.mxu0 0
  %751 = vmatpush1.bf16.msra.mxu0 0
  %752 = vmatprep.subr.bf16.mxu0 0
  %753 = vmatpush1.bf16.msra.mxu0 0
  %754 = vmatprep.subr.bf16.mxu0 0
  %755 = vmatpush1.bf16.msra.mxu0 0
  %756 = vmatprep.subr.bf16.mxu0 0
  %757 = vmatpush1.bf16.msra.mxu0 0
  %758 = vmatprep.subr.bf16.mxu0 0
  %759 = vmatpush1.bf16.msra.mxu0 0
  %760 = vmatprep.subr.bf16.mxu0 0
  %761 = vmatpush1.bf16.msra.mxu0 0
  %762 = vmatprep.subr.bf16.mxu0 0
  %763 = vmatpush1.bf16.msra.mxu0 0
  %764 = vmatprep.subr.bf16.mxu0 0
  %765 = vmatpush1.bf16.msra.mxu0 0
  %766 = vmatprep.subr.bf16.mxu0 0
  %767 = vmatpush1.bf16.msra.mxu0 0
  %768 = vmatprep.subr.bf16.mxu0 0
  %769 = vmatpush1.bf16.msra.mxu0 0
  %770 = vmatprep.subr.bf16.mxu0 0
  %771 = vmatpush1.bf16.msra.mxu0 0
  %772 = vmatprep.subr.bf16.mxu0 0
  %773 = vmatpush1.bf16.msra.mxu0 0
  %774 = vmatprep.mubr.bf16.mxu0 0
  %775 = vmatmul.mubr.bf16.gmra.mrb[0].mxu0 %v267
  %v776 = vpop.f32.mrb[0].mxu0
  %v777 = vadd.f32 %v724, %v776
  %v778 = vpop.f32.mrb[0].mxu0
  %v779 = vpop.f32.mrb[0].mxu0
  %v780 = vadd.f32 %v724, %v779
  %v781 = vpop.f32.mrb[0].mxu0
  %782 = vmatprep.mubr.bf16.mxu0 0
  %783 = vmatmul.mubr.bf16.gmra.mrb[0].mxu0 %v270
  %v784 = vpop.f32.mrb[0].mxu0
  %v785 = vadd.f32 %v724, %v784
  %v786 = vpop.f32.mrb[0].mxu0
  %v787 = vpop.f32.mrb[0].mxu0
  %v788 = vadd.f32 %v724, %v787
  %v789 = vpop.f32.mrb[0].mxu0
  %790 = vmatprep.mubr.bf16.mxu0 0
  %791 = vmatmul.mubr.bf16.gmra.mrb[0].mxu0 %v273
  %v792 = vpop.f32.mrb[0].mxu0
  %v793 = vadd.f32 %v724, %v792
  %v794 = vpop.f32.mrb[0].mxu0
  %v795 = vpop.f32.mrb[0].mxu0
  %v796 = vadd.f32 %v724, %v795
  %v797 = vpop.f32.mrb[0].mxu0
  %798 = vmatprep.mubr.bf16.mxu0 0
  %799 = vmatmul.mubr.bf16.gmra.mrb[0].mxu0 %v276
  %v800 = vpop.f32.mrb[0].mxu0
  %v801 = vadd.f32 %v724, %v800
  %v802 = vpop.f32.mrb[0].mxu0
  %v803 = vpop.f32.mrb[0].mxu0
  %v804 = vadd.f32 %v724, %v803
  %v805 = vpop.f32.mrb[0].mxu0
  %806 = vdwg.mxu0
  %v807 = vmax.f32 %v777, 0.0
  %v808 = vmax.f32 %v780, 0.0
  %v809 = vmax.f32 %v785, 0.0
  %v810 = vmax.f32 %v788, 0.0
  %v811 = vmax.f32 %v793, 0.0
  %v812 = vmax.f32 %v796, 0.0
  %v813 = vmax.f32 %v801, 0.0
  %v814 = vmax.f32 %v804, 0.0
  %815 = vst.msk [vmem:[#allocation2] sm:$0xff] %vm452, %v659
  %816 = vst.msk [vmem:[#allocation2 + $0x8] sm:$0xff] %vm452, %v660
  %817 = vst.msk [vmem:[#allocation2 + $0x10] sm:$0xff] %vm452, %v661
  %818 = vst.msk [vmem:[#allocation2 + $0x18] sm:$0xff] %vm452, %v662
  %819 = vst.msk [vmem:[#allocation2 + $0x20] sm:$0xff] %vm452, %v663
  %820 = vst.msk [vmem:[#allocation2 + $0x28] sm:$0xff] %vm452, %v664
  %821 = vst.msk [vmem:[#allocation2 + $0x30] sm:$0xff] %vm452, %v665
  %822 = vst.msk [vmem:[#allocation2 + $0x38] sm:$0xff] %vm452, %v666
  %831 = vrot.lane.b32.xlu0 %v807, 32
  %v832 = vpop.permute.xlu0 %831
  %833 = vrot.lane.b32.xlu0 %v808, 32
  %v834 = vpop.permute.xlu0 %833
  %835 = vrot.lane.b32.xlu0 %v809, 32
  %v836 = vpop.permute.xlu0 %835
  %837 = vrot.lane.b32.xlu0 %v810, 32
  %v838 = vpop.permute.xlu0 %837
  %839 = vrot.lane.b32.xlu0 %v811, 32
  %v840 = vpop.permute.xlu0 %839
  %841 = vrot.lane.b32.xlu0 %v812, 32
  %v842 = vpop.permute.xlu0 %841
  %843 = vrot.lane.b32.xlu0 %v813, 32
  %v844 = vpop.permute.xlu0 %843
  %845 = vrot.lane.b32.xlu0 %v814, 32
  %v846 = vpop.permute.xlu0 %845
  %855 = vst.msk [vmem:[#allocation2] sm:$0xff] %vm493, %v832
  %856 = vst.msk [vmem:[#allocation2 + $0x8] sm:$0xff] %vm493, %v834
  %857 = vst.msk [vmem:[#allocation2 + $0x10] sm:$0xff] %vm493, %v836
  %858 = vst.msk [vmem:[#allocation2 + $0x18] sm:$0xff] %vm493, %v838
  %859 = vst.msk [vmem:[#allocation2 + $0x20] sm:$0xff] %vm493, %v840
  %860 = vst.msk [vmem:[#allocation2 + $0x28] sm:$0xff] %vm493, %v842
  %861 = vst.msk [vmem:[#allocation2 + $0x30] sm:$0xff] %vm493, %v844
  %862 = vst.msk [vmem:[#allocation2 + $0x38] sm:$0xff] %vm493, %v846
  %863 = vst.msk [vmem:[#allocation2] sm:$0xff] %vm502, %v707
  %864 = vst.msk [vmem:[#allocation2 + $0x8] sm:$0xff] %vm502, %v708
  %865 = vst.msk [vmem:[#allocation2 + $0x10] sm:$0xff] %vm502, %v709
  %866 = vst.msk [vmem:[#allocation2 + $0x18] sm:$0xff] %vm502, %v710
  %867 = vst.msk [vmem:[#allocation2 + $0x20] sm:$0xff] %vm502, %v711
  %868 = vst.msk [vmem:[#allocation2 + $0x28] sm:$0xff] %vm502, %v712
  %869 = vst.msk [vmem:[#allocation2 + $0x30] sm:$0xff] %vm502, %v713
  %870 = vst.msk [vmem:[#allocation2 + $0x38] sm:$0xff] %vm502, %v714
  %v871 = vld [vmem:[#allocation2] sm:$0xff]
  %v872 = vld [vmem:[#allocation2 + $0x8] sm:$0xff]
  %v873 = vld [vmem:[#allocation2 + $0x10] sm:$0xff]
  %v874 = vld [vmem:[#allocation2 + $0x18] sm:$0xff]
  %v875 = vld [vmem:[#allocation2 + $0x20] sm:$0xff]
  %v876 = vld [vmem:[#allocation2 + $0x28] sm:$0xff]
  %v877 = vld [vmem:[#allocation2 + $0x30] sm:$0xff]
  %v878 = vld [vmem:[#allocation2 + $0x38] sm:$0xff]
  %v879 = vpack.c.bf16 %v872, %v871
  %v880 = vpack.c.bf16 %v874, %v873
  %v881 = vpack.c.bf16 %v876, %v875
  %v882 = vpack.c.bf16 %v878, %v877
  %v883 = vld [vmem:[%s10] sm:$0xf]
  %v884 = vld [vmem:[%s10 + $0x4] sm:$0xf]
  %v885 = vld [vmem:[%s10 + $0x8] sm:$0xf]
  %v886 = vld [vmem:[%s10 + $0xc] sm:$0xf]
  %v887 = vld [vmem:[%s10 + $0x10] sm:$0xf]
  %v888 = vld [vmem:[%s10 + $0x14] sm:$0xf]
  %v889 = vld [vmem:[%s10 + $0x18] sm:$0xf]
  %v890 = vld [vmem:[%s10 + $0x1c] sm:$0xf]
  %v891 = vld [vmem:[%s10 + $0x20] sm:$0xf]
  %v892 = vld [vmem:[%s10 + $0x24] sm:$0xf]
  %v893 = vld [vmem:[%s10 + $0x28] sm:$0xf]
  %v894 = vld [vmem:[%s10 + $0x2c] sm:$0xf]
  %v895 = vld [vmem:[%s10 + $0x30] sm:$0xf]
  %v896 = vld [vmem:[%s10 + $0x34] sm:$0xf]
  %v897 = vld [vmem:[%s10 + $0x38] sm:$0xf]
  %v898 = vld [vmem:[%s10 + $0x3c] sm:$0xf]
  %v899 = vld [vmem:[%s11] sm:$0x1]
  %v901 = vlaneseq
  %v902 = vshrl.u32 %v901, 7
  %v903 = vsub.s32 0, %v902
  %v904 = vrot.slane %v899, %v903
  %v922 = vunpack.c.l.b16 %v883
  %v923 = vunpack.c.l.b16 %v884
  %v924 = vunpack.c.l.b16 %v885
  %v925 = vunpack.c.l.b16 %v886
  %v926 = vunpack.c.l.b16 %v887
  %v927 = vunpack.c.l.b16 %v888
  %v928 = vunpack.c.l.b16 %v889
  %v929 = vunpack.c.l.b16 %v890
  %v930 = vunpack.c.l.b16 %v891
  %v931 = vunpack.c.l.b16 %v892
  %v932 = vunpack.c.l.b16 %v893
  %v933 = vunpack.c.l.b16 %v894
  %v934 = vunpack.c.l.b16 %v895
  %v935 = vunpack.c.l.b16 %v896
  %v936 = vunpack.c.l.b16 %v897
  %v937 = vunpack.c.l.b16 %v898
  %v938 = vpack.c.b16 %v923, %v922
  %v939 = vpack.c.b16 %v925, %v924
  %v940 = vpack.c.b16 %v927, %v926
  %v941 = vpack.c.b16 %v929, %v928
  %v942 = vpack.c.b16 %v931, %v930
  %v943 = vpack.c.b16 %v933, %v932
  %v944 = vpack.c.b16 %v935, %v934
  %v945 = vpack.c.b16 %v937, %v936
  %954 = vmatprep.subr.bf16.mxu0 0
  %955 = vmatpush1.bf16.msra.mxu0 %v938
  %956 = vmatprep.subr.bf16.mxu0 0
  %957 = vmatpush1.bf16.msra.mxu0 %v939
  %958 = vmatprep.subr.bf16.mxu0 0
  %959 = vmatpush1.bf16.msra.mxu0 %v940
  %960 = vmatprep.subr.bf16.mxu0 0
  %961 = vmatpush1.bf16.msra.mxu0 %v941
  %962 = vmatprep.subr.bf16.mxu0 0
  %963 = vmatpush1.bf16.msra.mxu0 %v942
  %964 = vmatprep.subr.bf16.mxu0 0
  %965 = vmatpush1.bf16.msra.mxu0 %v943
  %966 = vmatprep.subr.bf16.mxu0 0
  %967 = vmatpush1.bf16.msra.mxu0 %v944
  %968 = vmatprep.subr.bf16.mxu0 0
  %969 = vmatpush1.bf16.msra.mxu0 %v945
  %970 = vmatprep.subr.bf16.mxu0 0
  %971 = vmatpush1.bf16.msra.mxu0 0
  %972 = vmatprep.subr.bf16.mxu0 0
  %973 = vmatpush1.bf16.msra.mxu0 0
  %974 = vmatprep.subr.bf16.mxu0 0
  %975 = vmatpush1.bf16.msra.mxu0 0
  %976 = vmatprep.subr.bf16.mxu0 0
  %977 = vmatpush1.bf16.msra.mxu0 0
  %978 = vmatprep.subr.bf16.mxu0 0
  %979 = vmatpush1.bf16.msra.mxu0 0
  %980 = vmatprep.subr.bf16.mxu0 0
  %981 = vmatpush1.bf16.msra.mxu0 0
  %982 = vmatprep.subr.bf16.mxu0 0
  %983 = vmatpush1.bf16.msra.mxu0 0
  %984 = vmatprep.subr.bf16.mxu0 0
  %985 = vmatpush1.bf16.msra.mxu0 0
  %986 = vmatprep.mubr.bf16.mxu0 0
  %987 = vmatmul.mubr.bf16.gmra.mrb[0].mxu0 %v879
  %v988 = vpop.f32.mrb[0].mxu0
  %v989 = vadd.f32 %v904, %v988
  %v990 = vpop.f32.mrb[0].mxu0
  %v991 = vpop.f32.mrb[0].mxu0
  %v992 = vadd.f32 %v904, %v991
  %v993 = vpop.f32.mrb[0].mxu0
  %994 = vmatprep.mubr.bf16.mxu0 0
  %995 = vmatmul.mubr.bf16.gmra.mrb[0].mxu0 %v880
  %v996 = vpop.f32.mrb[0].mxu0
  %v997 = vadd.f32 %v904, %v996
  %v998 = vpop.f32.mrb[0].mxu0
  %v999 = vpop.f32.mrb[0].mxu0
  %v1000 = vadd.f32 %v904, %v999
  %v1001 = vpop.f32.mrb[0].mxu0
  %1002 = vmatprep.mubr.bf16.mxu0 0
  %1003 = vmatmul.mubr.bf16.gmra.mrb[0].mxu0 %v881
  %v1004 = vpop.f32.mrb[0].mxu0
  %v1005 = vadd.f32 %v904, %v1004
  %v1006 = vpop.f32.mrb[0].mxu0
  %v1007 = vpop.f32.mrb[0].mxu0
  %v1008 = vadd.f32 %v904, %v1007
  %v1009 = vpop.f32.mrb[0].mxu0
  %1010 = vmatprep.mubr.bf16.mxu0 0
  %1011 = vmatmul.mubr.bf16.gmra.mrb[0].mxu0 %v882
  %v1012 = vpop.f32.mrb[0].mxu0
  %v1013 = vadd.f32 %v904, %v1012
  %v1014 = vpop.f32.mrb[0].mxu0
  %v1015 = vpop.f32.mrb[0].mxu0
  %v1016 = vadd.f32 %v904, %v1015
  %v1017 = vpop.f32.mrb[0].mxu0
  %1018 = vdwg.mxu0
  %v1019 = vmax.f32 %v989, 0.0
  %v1020 = vmax.f32 %v992, 0.0
  %v1021 = vmax.f32 %v997, 0.0
  %v1022 = vmax.f32 %v1000, 0.0
  %v1023 = vmax.f32 %v1005, 0.0
  %v1024 = vmax.f32 %v1008, 0.0
  %v1025 = vmax.f32 %v1013, 0.0
  %v1026 = vmax.f32 %v1016, 0.0
  %1035 = vrot.lane.b32.xlu0 %v989, 96
  %v1036 = vpop.permute.xlu0 %1035
  %1037 = vrot.lane.b32.xlu0 %v992, 96
  %v1038 = vpop.permute.xlu0 %1037
  %1039 = vrot.lane.b32.xlu0 %v997, 96
  %v1040 = vpop.permute.xlu0 %1039
  %1041 = vrot.lane.b32.xlu0 %v1000, 96
  %v1042 = vpop.permute.xlu0 %1041
  %1043 = vrot.lane.b32.xlu0 %v1005, 96
  %v1044 = vpop.permute.xlu0 %1043
  %1045 = vrot.lane.b32.xlu0 %v1008, 96
  %v1046 = vpop.permute.xlu0 %1045
  %1047 = vrot.lane.b32.xlu0 %v1013, 96
  %v1048 = vpop.permute.xlu0 %1047
  %1049 = vrot.lane.b32.xlu0 %v1016, 96
  %v1050 = vpop.permute.xlu0 %1049
  %v1059 = vmul.f32 %v989, %v1036
  %v1060 = vmul.f32 %v992, %v1038
  %v1061 = vmul.f32 %v997, %v1040
  %v1062 = vmul.f32 %v1000, %v1042
  %v1063 = vmul.f32 %v1005, %v1044
  %v1064 = vmul.f32 %v1008, %v1046
  %v1065 = vmul.f32 %v1013, %v1048
  %v1066 = vmul.f32 %v1016, %v1050
  %v1067 = vmax.f32 %v1059, 0.0
  %v1068 = vmax.f32 %v1060, 0.0
  %v1069 = vmax.f32 %v1061, 0.0
  %v1070 = vmax.f32 %v1062, 0.0
  %v1071 = vmax.f32 %v1063, 0.0
  %v1072 = vmax.f32 %v1064, 0.0
  %v1073 = vmax.f32 %v1065, 0.0
  %v1074 = vmax.f32 %v1066, 0.0
  %v1075 = vpack.c.bf16 %v992, %v989
  %v1076 = vpack.c.bf16 %v1000, %v997
  %v1077 = vpack.c.bf16 %v1008, %v1005
  %v1078 = vpack.c.bf16 %v1016, %v1013
  %v1079 = vld [vmem:[%s12] sm:$0x1]
  %v1081 = vlaneseq
  %v1082 = vshrl.u32 %v1081, 7
  %v1083 = vsub.s32 0, %v1082
  %v1084 = vrot.slane %v1079, %v1083
  %1090 = vrot.lane.b32.xlu0 %v1075, 96
  %v1091 = vpop.permute.xlu0 %1090
  %1092 = vrot.lane.b32.xlu0 %v1076, 96
  %v1093 = vpop.permute.xlu0 %1092
  %1094 = vrot.lane.b32.xlu0 %v1077, 96
  %v1095 = vpop.permute.xlu0 %1094
  %1096 = vrot.lane.b32.xlu0 %v1078, 96
  %v1097 = vpop.permute.xlu0 %1096
  %1102 = vmatprep.subr.bf16.mxu0 0
  %1103 = vmatpush1.bf16.msra.mxu0 %v1091
  %1104 = vmatprep.subr.bf16.mxu0 0
  %1105 = vmatpush1.bf16.msra.mxu0 %v1093
  %1106 = vmatprep.subr.bf16.mxu0 0
  %1107 = vmatpush1.bf16.msra.mxu0 %v1095
  %1108 = vmatprep.subr.bf16.mxu0 0
  %1109 = vmatpush1.bf16.msra.mxu0 %v1097
  %1110 = vmatprep.subr.bf16.mxu0 0
  %1111 = vmatpush1.bf16.msra.mxu0 0
  %1112 = vmatprep.subr.bf16.mxu0 0
  %1113 = vmatpush1.bf16.msra.mxu0 0
  %1114 = vmatprep.subr.bf16.mxu0 0
  %1115 = vmatpush1.bf16.msra.mxu0 0
  %1116 = vmatprep.subr.bf16.mxu0 0
  %1117 = vmatpush1.bf16.msra.mxu0 0
  %1118 = vmatprep.subr.bf16.mxu0 0
  %1119 = vmatpush1.bf16.msra.mxu0 0
  %1120 = vmatprep.subr.bf16.mxu0 0
  %1121 = vmatpush1.bf16.msra.mxu0 0
  %1122 = vmatprep.subr.bf16.mxu0 0
  %1123 = vmatpush1.bf16.msra.mxu0 0
  %1124 = vmatprep.subr.bf16.mxu0 0
  %1125 = vmatpush1.bf16.msra.mxu0 0
  %1126 = vmatprep.subr.bf16.mxu0 0
  %1127 = vmatpush1.bf16.msra.mxu0 0
  %1128 = vmatprep.subr.bf16.mxu0 0
  %1129 = vmatpush1.bf16.msra.mxu0 0
  %1130 = vmatprep.subr.bf16.mxu0 0
  %1131 = vmatpush1.bf16.msra.mxu0 0
  %1132 = vmatprep.subr.bf16.mxu0 0
  %1133 = vmatpush1.bf16.msra.mxu0 0
  %1134 = vmatprep.mubr.bf16.mxu0 0
  %1135 = vmatmul.mubr.bf16.gmra.mrb[0].mxu0 %v267
  %v1136 = vpop.f32.mrb[0].mxu0
  %v1137 = vadd.f32 %v1084, %v1136
  %v1138 = vpop.f32.mrb[0].mxu0
  %v1139 = vpop.f32.mrb[0].mxu0
  %v1140 = vadd.f32 %v1084, %v1139
  %v1141 = vpop.f32.mrb[0].mxu0
  %1142 = vmatprep.mubr.bf16.mxu0 0
  %1143 = vmatmul.mubr.bf16.gmra.mrb[0].mxu0 %v270
  %v1144 = vpop.f32.mrb[0].mxu0
  %v1145 = vadd.f32 %v1084, %v1144
  %v1146 = vpop.f32.mrb[0].mxu0
  %v1147 = vpop.f32.mrb[0].mxu0
  %v1148 = vadd.f32 %v1084, %v1147
  %v1149 = vpop.f32.mrb[0].mxu0
  %1150 = vmatprep.mubr.bf16.mxu0 0
  %1151 = vmatmul.mubr.bf16.gmra.mrb[0].mxu0 %v273
  %v1152 = vpop.f32.mrb[0].mxu0
  %v1153 = vadd.f32 %v1084, %v1152
  %v1154 = vpop.f32.mrb[0].mxu0
  %v1155 = vpop.f32.mrb[0].mxu0
  %v1156 = vadd.f32 %v1084, %v1155
  %v1157 = vpop.f32.mrb[0].mxu0
  %1158 = vmatprep.mubr.bf16.mxu0 0
  %1159 = vmatmul.mubr.bf16.gmra.mrb[0].mxu0 %v276
  %v1160 = vpop.f32.mrb[0].mxu0
  %v1161 = vadd.f32 %v1084, %v1160
  %v1162 = vpop.f32.mrb[0].mxu0
  %v1163 = vpop.f32.mrb[0].mxu0
  %v1164 = vadd.f32 %v1084, %v1163
  %v1165 = vpop.f32.mrb[0].mxu0
  %1166 = vdwg.mxu0
  %v1167 = vmax.f32 %v1137, 0.0
  %v1168 = vmax.f32 %v1140, 0.0
  %v1169 = vmax.f32 %v1145, 0.0
  %v1170 = vmax.f32 %v1148, 0.0
  %v1171 = vmax.f32 %v1153, 0.0
  %v1172 = vmax.f32 %v1156, 0.0
  %v1173 = vmax.f32 %v1161, 0.0
  %v1174 = vmax.f32 %v1164, 0.0
  %1175 = vst.msk [vmem:[#allocation2] sm:$0xff] %vm452, %v1019
  %1176 = vst.msk [vmem:[#allocation2 + $0x8] sm:$0xff] %vm452, %v1020
  %1177 = vst.msk [vmem:[#allocation2 + $0x10] sm:$0xff] %vm452, %v1021
  %1178 = vst.msk [vmem:[#allocation2 + $0x18] sm:$0xff] %vm452, %v1022
  %1179 = vst.msk [vmem:[#allocation2 + $0x20] sm:$0xff] %vm452, %v1023
  %1180 = vst.msk [vmem:[#allocation2 + $0x28] sm:$0xff] %vm452, %v1024
  %1181 = vst.msk [vmem:[#allocation2 + $0x30] sm:$0xff] %vm452, %v1025
  %1182 = vst.msk [vmem:[#allocation2 + $0x38] sm:$0xff] %vm452, %v1026
  %1191 = vrot.lane.b32.xlu0 %v1167, 32
  %v1192 = vpop.permute.xlu0 %1191
  %1193 = vrot.lane.b32.xlu0 %v1168, 32
  %v1194 = vpop.permute.xlu0 %1193
  %1195 = vrot.lane.b32.xlu0 %v1169, 32
  %v1196 = vpop.permute.xlu0 %1195
  %1197 = vrot.lane.b32.xlu0 %v1170, 32
  %v1198 = vpop.permute.xlu0 %1197
  %1199 = vrot.lane.b32.xlu0 %v1171, 32
  %v1200 = vpop.permute.xlu0 %1199
  %1201 = vrot.lane.b32.xlu0 %v1172, 32
  %v1202 = vpop.permute.xlu0 %1201
  %1203 = vrot.lane.b32.xlu0 %v1173, 32
  %v1204 = vpop.permute.xlu0 %1203
  %1205 = vrot.lane.b32.xlu0 %v1174, 32
  %v1206 = vpop.permute.xlu0 %1205
  %1215 = vst.msk [vmem:[#allocation2] sm:$0xff] %vm493, %v1192
  %1216 = vst.msk [vmem:[#allocation2 + $0x8] sm:$0xff] %vm493, %v1194
  %1217 = vst.msk [vmem:[#allocation2 + $0x10] sm:$0xff] %vm493, %v1196
  %1218 = vst.msk [vmem:[#allocation2 + $0x18] sm:$0xff] %vm493, %v1198
  %1219 = vst.msk [vmem:[#allocation2 + $0x20] sm:$0xff] %vm493, %v1200
  %1220 = vst.msk [vmem:[#allocation2 + $0x28] sm:$0xff] %vm493, %v1202
  %1221 = vst.msk [vmem:[#allocation2 + $0x30] sm:$0xff] %vm493, %v1204
  %1222 = vst.msk [vmem:[#allocation2 + $0x38] sm:$0xff] %vm493, %v1206
  %1223 = vst.msk [vmem:[#allocation2] sm:$0xff] %vm502, %v1067
  %1224 = vst.msk [vmem:[#allocation2 + $0x8] sm:$0xff] %vm502, %v1068
  %1225 = vst.msk [vmem:[#allocation2 + $0x10] sm:$0xff] %vm502, %v1069
  %1226 = vst.msk [vmem:[#allocation2 + $0x18] sm:$0xff] %vm502, %v1070
  %1227 = vst.msk [vmem:[#allocation2 + $0x20] sm:$0xff] %vm502, %v1071
  %1228 = vst.msk [vmem:[#allocation2 + $0x28] sm:$0xff] %vm502, %v1072
  %1229 = vst.msk [vmem:[#allocation2 + $0x30] sm:$0xff] %vm502, %v1073
  %1230 = vst.msk [vmem:[#allocation2 + $0x38] sm:$0xff] %vm502, %v1074
  %v1231 = vld [vmem:[%s2] sm:$0x3]
  %v1232 = vld [vmem:[#allocation2] sm:$0xff]
  %v1233 = vld [vmem:[#allocation2 + $0x8] sm:$0xff]
  %v1234 = vld [vmem:[#allocation2 + $0x10] sm:$0xff]
  %v1235 = vld [vmem:[#allocation2 + $0x18] sm:$0xff]
  %v1236 = vld [vmem:[#allocation2 + $0x20] sm:$0xff]
  %v1237 = vld [vmem:[#allocation2 + $0x28] sm:$0xff]
  %v1238 = vld [vmem:[#allocation2 + $0x30] sm:$0xff]
  %v1239 = vld [vmem:[#allocation2 + $0x38] sm:$0xff]
  %v1241 = vsel %vm265, %v1231, 0
  %1243 = vmatprep.subr.mxu0 0.0
  %1244 = vmatpush1.msra.mxu0 %v1232
  %1245 = vmatprep.subr.mxu0 0.0
  %1246 = vmatpush1.msra.mxu0 %v1233
  %1247 = vmatprep.subr.mxu0 0.0
  %1248 = vmatpush1.msra.mxu0 %v1234
  %1249 = vmatprep.subr.mxu0 0.0
  %1250 = vmatpush1.msra.mxu0 %v1235
  %1251 = vmatprep.subr.mxu0 0.0
  %1252 = vmatpush1.msra.mxu0 %v1236
  %1253 = vmatprep.subr.mxu0 0.0
  %1254 = vmatpush1.msra.mxu0 %v1237
  %1255 = vmatprep.subr.mxu0 0.0
  %1256 = vmatpush1.msra.mxu0 %v1238
  %1257 = vmatprep.subr.mxu0 0.0
  %1258 = vmatpush1.msra.mxu0 %v1239
  %1259 = vmatprep.subr.mxu0 0.0
  %1260 = vmatpush1.msra.mxu0 0.0
  %1261 = vmatprep.subr.mxu0 0.0
  %1262 = vmatpush1.msra.mxu0 0.0
  %1263 = vmatprep.subr.mxu0 0.0
  %1264 = vmatpush1.msra.mxu0 0.0
  %1265 = vmatprep.subr.mxu0 0.0
  %1266 = vmatpush1.msra.mxu0 0.0
  %1267 = vmatprep.subr.mxu0 0.0
  %1268 = vmatpush1.msra.mxu0 0.0
  %1269 = vmatprep.subr.mxu0 0.0
  %1270 = vmatpush1.msra.mxu0 0.0
  %1271 = vmatprep.subr.mxu0 0.0
  %1272 = vmatpush1.msra.mxu0 0.0
  %1273 = vmatprep.subr.mxu0 0.0
  %1274 = vmatpush1.msra.mxu0 0.0
  %1275 = vmatprep.subr.mxu0 0.0
  %1276 = vmatpush1.msra.mxu0 0.0
  %1277 = vmatprep.subr.mxu0 0.0
  %1278 = vmatpush1.msra.mxu0 0.0
  %1279 = vmatprep.subr.mxu0 0.0
  %1280 = vmatpush1.msra.mxu0 0.0
  %1281 = vmatprep.subr.mxu0 0.0
  %1282 = vmatpush1.msra.mxu0 0.0
  %1283 = vmatprep.subr.mxu0 0.0
  %1284 = vmatpush1.msra.mxu0 0.0
  %1285 = vmatprep.subr.mxu0 0.0
  %1286 = vmatpush1.msra.mxu0 0.0
  %1287 = vmatprep.subr.mxu0 0.0
  %1288 = vmatpush1.msra.mxu0 0.0
  %1289 = vmatprep.subr.mxu0 0.0
  %1290 = vmatpush1.msra.mxu0 0.0
  %1291 = vmatprep.subr.mxu0 0.0
  %1292 = vmatpush1.msra.mxu0 0.0
  %1293 = vmatprep.subr.mxu0 0.0
  %1294 = vmatpush1.msra.mxu0 0.0
  %1295 = vmatprep.subr.mxu0 0.0
  %1296 = vmatpush1.msra.mxu0 0.0
  %1297 = vmatprep.subr.mxu0 0.0
  %1298 = vmatpush1.msra.mxu0 0.0
  %1299 = vmatprep.subr.mxu0 0.0
  %1300 = vmatpush1.msra.mxu0 0.0
  %1301 = vmatprep.subr.mxu0 0.0
  %1302 = vmatpush1.msra.mxu0 0.0
  %1303 = vmatprep.subr.mxu0 0.0
  %1304 = vmatpush1.msra.mxu0 0.0
  %1305 = vmatprep.subr.mxu0 0.0
  %1306 = vmatpush1.msra.mxu0 0.0
  %1307 = vmatprep.mubr.f32.mxu0 0.0
  %1308 = vmatmul.mubr.f32.gmra.mrb[0].mxu0 %v1241
  %v1309 = vpop.f32.mrb[0].mxu0
  %v1310 = vadd.f32 0.0, %v1309
  %v1311 = vpop.f32.mrb[0].mxu0
  %1312 = vdwg.mxu0
  %v1313 = vld [vmem:[%s13] sm:$0xff]
  %v1314 = vld [vmem:[%s13 + $0x8] sm:$0xff]
  %v1315 = vld [vmem:[%s13 + $0x10] sm:$0xff]
  %v1316 = vld [vmem:[%s13 + $0x18] sm:$0xff]
  %v1317 = vld [vmem:[%s13 + $0x20] sm:$0xff]
  %v1318 = vld [vmem:[%s13 + $0x28] sm:$0xff]
  %v1319 = vld [vmem:[%s13 + $0x30] sm:$0xff]
  %v1320 = vld [vmem:[%s13 + $0x38] sm:$0xff]
  %v1321 = vld [vmem:[%s13 + $0x40] sm:$0xff]
  %v1322 = vld [vmem:[%s13 + $0x48] sm:$0xff]
  %v1323 = vld [vmem:[%s13 + $0x50] sm:$0xff]
  %v1324 = vld [vmem:[%s13 + $0x58] sm:$0xff]
  %v1325 = vld [vmem:[%s13 + $0x60] sm:$0xff]
  %v1326 = vld [vmem:[%s13 + $0x68] sm:$0xff]
  %v1327 = vld [vmem:[%s13 + $0x70] sm:$0xff]
  %v1328 = vld [vmem:[%s13 + $0x78] sm:$0xff]
  %v1329 = vld [vmem:[%s14] sm:$0x1]
  %v1331 = vlaneseq
  %v1332 = vshrl.u32 %v1331, 7
  %v1333 = vsub.s32 0, %v1332
  %v1334 = vrot.slane %v1329, %v1333
  %1336 = vmatprep.subr.mxu0 0.0
  %1337 = vmatpush1.msra.mxu0 %v1313
  %1338 = vmatprep.subr.mxu0 0.0
  %1339 = vmatpush1.msra.mxu0 %v1314
  %1340 = vmatprep.subr.mxu0 0.0
  %1341 = vmatpush1.msra.mxu0 %v1315
  %1342 = vmatprep.subr.mxu0 0.0
  %1343 = vmatpush1.msra.mxu0 %v1316
  %1344 = vmatprep.subr.mxu0 0.0
  %1345 = vmatpush1.msra.mxu0 %v1317
  %1346 = vmatprep.subr.mxu0 0.0
  %1347 = vmatpush1.msra.mxu0 %v1318
  %1348 = vmatprep.subr.mxu0 0.0
  %1349 = vmatpush1.msra.mxu0 %v1319
  %1350 = vmatprep.subr.mxu0 0.0
  %1351 = vmatpush1.msra.mxu0 %v1320
  %1352 = vmatprep.subr.mxu0 0.0
  %1353 = vmatpush1.msra.mxu0 %v1321
  %1354 = vmatprep.subr.mxu0 0.0
  %1355 = vmatpush1.msra.mxu0 %v1322
  %1356 = vmatprep.subr.mxu0 0.0
  %1357 = vmatpush1.msra.mxu0 %v1323
  %1358 = vmatprep.subr.mxu0 0.0
  %1359 = vmatpush1.msra.mxu0 %v1324
  %1360 = vmatprep.subr.mxu0 0.0
  %1361 = vmatpush1.msra.mxu0 %v1325
  %1362 = vmatprep.subr.mxu0 0.0
  %1363 = vmatpush1.msra.mxu0 %v1326
  %1364 = vmatprep.subr.mxu0 0.0
  %1365 = vmatpush1.msra.mxu0 %v1327
  %1366 = vmatprep.subr.mxu0 0.0
  %1367 = vmatpush1.msra.mxu0 %v1328
  %1368 = vmatprep.subr.mxu0 0.0
  %1369 = vmatpush1.msra.mxu0 0.0
  %1370 = vmatprep.subr.mxu0 0.0
  %1371 = vmatpush1.msra.mxu0 0.0
  %1372 = vmatprep.subr.mxu0 0.0
  %1373 = vmatpush1.msra.mxu0 0.0
  %1374 = vmatprep.subr.mxu0 0.0
  %1375 = vmatpush1.msra.mxu0 0.0
  %1376 = vmatprep.subr.mxu0 0.0
  %1377 = vmatpush1.msra.mxu0 0.0
  %1378 = vmatprep.subr.mxu0 0.0
  %1379 = vmatpush1.msra.mxu0 0.0
  %1380 = vmatprep.subr.mxu0 0.0
  %1381 = vmatpush1.msra.mxu0 0.0
  %1382 = vmatprep.subr.mxu0 0.0
  %1383 = vmatpush1.msra.mxu0 0.0
  %1384 = vmatprep.subr.mxu0 0.0
  %1385 = vmatpush1.msra.mxu0 0.0
  %1386 = vmatprep.subr.mxu0 0.0
  %1387 = vmatpush1.msra.mxu0 0.0
  %1388 = vmatprep.subr.mxu0 0.0
  %1389 = vmatpush1.msra.mxu0 0.0
  %1390 = vmatprep.subr.mxu0 0.0
  %1391 = vmatpush1.msra.mxu0 0.0
  %1392 = vmatprep.subr.mxu0 0.0
  %1393 = vmatpush1.msra.mxu0 0.0
  %1394 = vmatprep.subr.mxu0 0.0
  %1395 = vmatpush1.msra.mxu0 0.0
  %1396 = vmatprep.subr.mxu0 0.0
  %1397 = vmatpush1.msra.mxu0 0.0
  %1398 = vmatprep.subr.mxu0 0.0
  %1399 = vmatpush1.msra.mxu0 0.0
  %1400 = vmatprep.mubr.f32.mxu0 0.0
  %1401 = vmatmul.mubr.f32.gmra.mrb[0].mxu0 %v1310
  %v1402 = vpop.f32.mrb[0].mxu0
  %v1403 = vadd.f32 %v1334, %v1402
  %v1404 = vpop.f32.mrb[0].mxu0
  %1405 = vdwg.mxu0
  %v1406 = vmax.f32 %v1403, 0.0
  %v1407 = vld [vmem:[%s15] sm:$0xff]
  %v1408 = vld [vmem:[%s15 + $0x8] sm:$0xff]
  %v1409 = vld [vmem:[%s15 + $0x10] sm:$0xff]
  %v1410 = vld [vmem:[%s15 + $0x18] sm:$0xff]
  %v1411 = vld [vmem:[#allocation3] sm:$0x1]
  %v1413 = vlaneseq
  %v1414 = vshrl.u32 %v1413, 7
  %v1415 = vsub.s32 0, %v1414
  %v1416 = vrot.slane %v1411, %v1415
  %v1419 = vsel %vm452, %v1406, 0
  %1421 = vmatprep.subr.mxu0 0.0
  %1422 = vmatpush1.msra.mxu0 %v1407
  %1423 = vmatprep.subr.mxu0 0.0
  %1424 = vmatpush1.msra.mxu0 %v1408
  %1425 = vmatprep.subr.mxu0 0.0
  %1426 = vmatpush1.msra.mxu0 %v1409
  %1427 = vmatprep.subr.mxu0 0.0
  %1428 = vmatpush1.msra.mxu0 %v1410
  %1429 = vmatprep.subr.mxu0 0.0
  %1430 = vmatpush1.msra.mxu0 0.0
  %1431 = vmatprep.subr.mxu0 0.0
  %1432 = vmatpush1.msra.mxu0 0.0
  %1433 = vmatprep.subr.mxu0 0.0
  %1434 = vmatpush1.msra.mxu0 0.0
  %1435 = vmatprep.subr.mxu0 0.0
  %1436 = vmatpush1.msra.mxu0 0.0
  %1437 = vmatprep.subr.mxu0 0.0
  %1438 = vmatpush1.msra.mxu0 0.0
  %1439 = vmatprep.subr.mxu0 0.0
  %1440 = vmatpush1.msra.mxu0 0.0
  %1441 = vmatprep.subr.mxu0 0.0
  %1442 = vmatpush1.msra.mxu0 0.0
  %1443 = vmatprep.subr.mxu0 0.0
  %1444 = vmatpush1.msra.mxu0 0.0
  %1445 = vmatprep.subr.mxu0 0.0
  %1446 = vmatpush1.msra.mxu0 0.0
  %1447 = vmatprep.subr.mxu0 0.0
  %1448 = vmatpush1.msra.mxu0 0.0
  %1449 = vmatprep.subr.mxu0 0.0
  %1450 = vmatpush1.msra.mxu0 0.0
  %1451 = vmatprep.subr.mxu0 0.0
  %1452 = vmatpush1.msra.mxu0 0.0
  %1453 = vmatprep.subr.mxu0 0.0
  %1454 = vmatpush1.msra.mxu0 0.0
  %1455 = vmatprep.subr.mxu0 0.0
  %1456 = vmatpush1.msra.mxu0 0.0
  %1457 = vmatprep.subr.mxu0 0.0
  %1458 = vmatpush1.msra.mxu0 0.0
  %1459 = vmatprep.subr.mxu0 0.0
  %1460 = vmatpush1.msra.mxu0 0.0
  %1461 = vmatprep.subr.mxu0 0.0
  %1462 = vmatpush1.msra.mxu0 0.0
  %1463 = vmatprep.subr.mxu0 0.0
  %1464 = vmatpush1.msra.mxu0 0.0
  %1465 = vmatprep.subr.mxu0 0.0
  %1466 = vmatpush1.msra.mxu0 0.0
  %1467 = vmatprep.subr.mxu0 0.0
  %1468 = vmatpush1.msra.mxu0 0.0
  %1469 = vmatprep.subr.mxu0 0.0
  %1470 = vmatpush1.msra.mxu0 0.0
  %1471 = vmatprep.subr.mxu0 0.0
  %1472 = vmatpush1.msra.mxu0 0.0
  %1473 = vmatprep.subr.mxu0 0.0
  %1474 = vmatpush1.msra.mxu0 0.0
  %1475 = vmatprep.subr.mxu0 0.0
  %1476 = vmatpush1.msra.mxu0 0.0
  %1477 = vmatprep.subr.mxu0 0.0
  %1478 = vmatpush1.msra.mxu0 0.0
  %1479 = vmatprep.subr.mxu0 0.0
  %1480 = vmatpush1.msra.mxu0 0.0
  %1481 = vmatprep.subr.mxu0 0.0
  %1482 = vmatpush1.msra.mxu0 0.0
  %1483 = vmatprep.subr.mxu0 0.0
  %1484 = vmatpush1.msra.mxu0 0.0
  %1485 = vmatprep.mubr.f32.mxu0 0.0
  %1486 = vmatmul.mubr.f32.gmra.mrb[0].mxu0 %v1419
  %v1487 = vpop.f32.mrb[0].mxu0
  %v1488 = vadd.f32 %v1416, %v1487
  %v1489 = vpop.f32.mrb[0].mxu0
  %1490 = vdwg.mxu0
  %vm1491 = vcmask 1024
  %1492 = vst.msk [vmem:[%s17] sm:$0x3] %vm1491, %v1488
  // Predicated region
  $region70: #{tpu_custom_call.1} parent=0 // pred_check
    _
  $region71: #{tpu_custom_call.1} parent=0 // pred_check_branch
    %1494 = sbr.rel (0) target = $region73
  $region72: #{tpu_custom_call.1} parent=0 // pred_region
    _
  $region73: #{tpu_custom_call.1} parent=0 // pred_fallthru
    _
  // Predicated region
  $region74: #{tpu_custom_call.1} parent=0 // pred_check
    _
  $region75: #{tpu_custom_call.1} parent=0 // pred_check_branch
    %1496 = sbr.rel (0) target = $region77
  $region76: #{tpu_custom_call.1} parent=0 // pred_region
    _
  $region77: #{tpu_custom_call.1} parent=0 // pred_fallthru
    _

</llo_original>
